<compile_context>
chip_gen: v7x
topology: tpu7x:2x2x1
jax: 0.10.0
libtpu: 0.0.40
codegen_flags: <defaults>
</compile_context>

<pallas_src>
import functools

import jax
import jax.numpy as jnp
from jax import lax
from jax.experimental import pallas as pl
from jax.experimental.pallas import tpu as pltpu


# ------------------------------ Pallas kernel --------------------------------

def wtfd_fused_kernel(xg_ref, w_ref, s_ref, t_ref, o_ref, *, th, hh, wh, c, out):
    """Fully fused wtfd_cat forward for one (batch, row-tile) grid step.

    xg_ref : (Hh, 4C, Wh)   per-batch gathered input, resident across the row axis.
    w_ref  : (5*out, 9*4C)  fused weights: rows [0:4*out] = the four x_H subpixels
                            (Haar ∘ upsample-conv taps ∘ 1x1, plus the direct x term
                            in the centre chunk), rows [4*out:] = x_L map.
    s_ref  : (5*out, 1)     folded conv-bias + eval-mode BN scale.
    t_ref  : (5*out, 1)     folded conv-bias + eval-mode BN shift.
    o_ref  : (th, 5*out, Wh) merged output rows: [0:4*out] = x_H (subpixel-packed),
                            [4*out:] = x_L.  Split + NCHW transpose happen in XLA.
    """
    four_c = 4 * c
    # hoisted loop invariants (JAX does not CSE broadcasts inside loops)
    w = w_ref[...]
    s = s_ref[...]
    t = t_ref[...]
    zcol = jnp.zeros((four_c, 1), jnp.float32)
    r0 = pl.program_id(1) * th

    def row_body(i_local, carry):
        row = r0 + i_local
        chunks = []
        for u in (0, 1, 2):                      # row taps: yh rows row-1, row, row+1
            ir = row + u - 1
            src = xg_ref[jnp.clip(ir, 0, hh - 1)]              # (4C, Wh)
            if u != 1:                                          # zero-pad DWT border rows
                src = jnp.where(jnp.logical_and(ir >= 0, ir < hh), src, 0.0)
            # column taps v=0,1,2 -> source columns j-1, j, j+1 with a zero border;
            # static 1-lane shifts (same lane-shift class as pltpu.roll) with the
            # zero boundary baked in, so no mask/where is needed.
            srcp = jnp.concatenate([zcol, src, zcol], axis=1)   # (4C, Wh+2)
            chunks.extend([srcp[:, v:v + wh] for v in (0, 1, 2)])
        s_mat = jnp.concatenate(chunks, axis=0)                 # (9*4C, Wh)
        z = jnp.dot(w, s_mat,
                    precision=lax.Precision.HIGHEST,
                    preferred_element_type=jnp.float32)         # (5*out, Wh)
        o_ref[i_local] = jnp.maximum(z * s + t, 0.0)
        return carry

    lax.fori_loop(0, th, row_body, 0)


# ----------------------- trace-time weight composition -----------------------

def _fold_bn(conv_bias, bn, eps=1e-5):
    """Fold conv bias + eval-mode BatchNorm into per-channel scale/shift."""
    s = bn["gamma"] / jnp.sqrt(bn["var"] + eps)
    t = (conv_bias - bn["mean"]) * s + bn["beta"]
    return s, t


def _build_fused_weights(params, C, out, eps=1e-5):
    f32 = jnp.float32
    mm = functools.partial(jnp.dot, precision=lax.Precision.HIGHEST)

    eye_c = jnp.eye(C, dtype=f32)
    # Haar analysis on the 2x2 block [a|b|c|d] (rows ordered (di,dj,c)); columns
    # are the (HL, LH, HH) bands in the implementation's convention.
    sign_h = jnp.array([[1., 1., 1.],
                        [1., -1., -1.],
                        [-1., 1., -1.],
                        [-1., -1., 1.]], f32)
    Dh = 0.5 * jnp.kron(sign_h, eye_c)                     # (4C, 3C)
    Dl = 0.5 * jnp.kron(jnp.ones((4, 1), f32), eye_c)      # (4C, C)  -> yL

    # ---- x_L: 2x2/s2 conv -> cat([x_ds, yL]) -> 1x1 conv, folded into one map --
    w_ds2d = params["w_ds"].reshape(4 * C, out)            # rows = (kh,kw,c) = (di,dj,c)
    wL_x, wL_y = params["w_L"][:out], params["w_L"][out:]
    WL = mm(w_ds2d, wL_x) + mm(Dl, wL_y)                   # (4C, out)
    sL, tL = _fold_bn(params["b_L"] + mm(params["b_ds"], wL_x), params["bn_L"], eps)

    # ---- x_H: nearest-x2 upsample + 3x3 conv == per-(subpixel, 2x2-tap) conv on
    #      yh_cat; pre-composed with the Haar map Dh and the 1x1 conv w_H --------
    wH_x, wH_y = params["w_H"][:C], params["w_H"][C:]
    w_up = params["w_up"]                                  # (3, 3, 3C, 3C)
    W_eff = [[jnp.zeros((3 * C, 3 * C), f32) for _ in range(4)] for _ in range(4)]
    for kh in range(3):
        for kw in range(3):
            for di in range(2):
                for dj in range(2):
                    dr = (di - 1 + kh) // 2 - di + 1       # tap row within 2x2 window
                    dc = (dj - 1 + kw) // 2 - dj + 1
                    W_eff[2 * di + dj][2 * dr + dc] = (
                        W_eff[2 * di + dj][2 * dr + dc] + w_up[kh, kw])
    sH, tH = _fold_bn(params["b_H"] + mm(params["b_up"], wH_y), params["bn_H"], eps)

    # ---- single fused LHS: rows = [4 x_H subpixels | x_L], cols = 9 (u,v) chunks
    #      of the gathered 4C vector (zero where a tap does not apply) -----------
    k9 = 9 * 4 * C
    Wcomb = jnp.zeros((5 * out, k9), f32)
    c11 = (1 * 3 + 1) * 4 * C                              # centre chunk (u,v)=(1,1)
    for di in range(2):
        for dj in range(2):
            sp = 2 * di + dj
            for dr in range(2):
                for dc in range(2):
                    u, v = di + dr, dj + dc
                    col0 = (u * 3 + v) * 4 * C
                    blk = mm(Dh, mm(W_eff[sp][2 * dr + dc], wH_y))   # (4C, out)
                    Wcomb = Wcomb.at[sp * out:(sp + 1) * out,
                                     col0:col0 + 4 * C].add(blk.T)
            # direct x term of the 1x1 conv lives at the (never-masked) centre chunk
            Wcomb = Wcomb.at[sp * out:(sp + 1) * out,
                             c11 + sp * C:c11 + (sp + 1) * C].add(wH_x.T)
    Wcomb = Wcomb.at[4 * out:, c11:c11 + 4 * C].add(WL.T)  # x_L uses only the centre

    s_comb = jnp.concatenate([jnp.tile(sH, 4), sL]).reshape(5 * out, 1)
    t_comb = jnp.concatenate([jnp.tile(tH, 4), tL]).reshape(5 * out, 1)
    return Wcomb, s_comb, t_comb


# ------------------------------ model forward --------------------------------

def wtfd_cat_forward(x_nchw, params, in_ch, out_ch, *, tile_rows=64):
    N, C, H, W = x_nchw.shape
    assert C == in_ch and H % 2 == 0 and W % 2 == 0
    assert out_ch == in_ch, "module requires out_ch == in_ch for the x_L concat"
    Hh, Wh = H // 2, W // 2
    f32 = jnp.float32
    x = x_nchw.astype(f32)

    # single XLA gather pass; it directly emits the kernel's planar lane-dense layout
    # xg[n, i, (di*2+dj)*C + c, j] = x[n, c, 2i+di, 2j+dj]
    xg = x.reshape(N, C, Hh, 2, Wh, 2).transpose(0, 2, 3, 5, 1, 4)
    xg = xg.reshape(N, Hh, 4 * C, Wh)

    Wcomb, s_comb, t_comb = _build_fused_weights(params, C, out_ch)
    k9 = Wcomb.shape[1]
    outm = 5 * out_ch

    th = min(tile_rows, Hh)
    grid = (N, pl.cdiv(Hh, th))                            # cdiv + ragged last tile

    o = pl.pallas_call(
        functools.partial(wtfd_fused_kernel, th=th, hh=Hh, wh=Wh, c=C, out=out_ch),
        grid=grid,
        in_specs=[
            # per-batch slab, resident across the row-tile axis (no re-DMA while n fixed)
            pl.BlockSpec((None, Hh, 4 * C, Wh), lambda n, r: (n, 0, 0, 0)),
            pl.BlockSpec((outm, k9), lambda n, r: (0, 0)),
            pl.BlockSpec((outm, 1), lambda n, r: (0, 0)),
            pl.BlockSpec((outm, 1), lambda n, r: (0, 0)),
        ],
        out_specs=pl.BlockSpec((None, th, outm, Wh), lambda n, r: (n, r, 0, 0)),
        out_shape=jax.ShapeDtypeStruct((N, Hh, outm, Wh), f32),
        compiler_params=pltpu.CompilerParams(
            dimension_semantics=("parallel", "parallel")),
    )(xg, Wcomb, s_comb, t_comb)

    # mandatory NCHW glue: subpixel un-interleave + channel-first transposes
    x_H = o[:, :, :4 * out_ch, :].reshape(N, Hh, 2, 2, out_ch, Wh)
    x_H = x_H.transpose(0, 4, 1, 2, 5, 3).reshape(N, out_ch, H, W)
    x_L = o[:, :, 4 * out_ch:, :].transpose(0, 2, 1, 3)
    return x_H, x_L


# ------------------------------ parameter init -------------------------------

def init_params(key, in_ch, out_ch):
    C = in_ch
    ks = jax.random.split(key, 16)

    def rnd(k, shape, scale=0.1):
        return scale * jax.random.normal(k, shape, jnp.float32)

    return {
        # yH_upsample_layer conv: Conv2d(3C, 3C, 3, pad=1); layout (kh, kw, cin, cout)
        "w_up": rnd(ks[0], (3, 3, 3 * C, 3 * C)),
        "b_up": rnd(ks[1], (3 * C,)),
        # yH_downchannel_layer: Conv2d(4C, out, 1) + BN(out)
        "w_H": rnd(ks[2], (4 * C, out_ch)),
        "b_H": rnd(ks[3], (out_ch,)),
        "bn_H": {
            "gamma": 1.0 + rnd(ks[4], (out_ch,)),
            "beta": rnd(ks[5], (out_ch,)),
            "mean": rnd(ks[6], (out_ch,)),
            "var": 1.0 + jnp.abs(rnd(ks[7], (out_ch,))),
        },
        # yL_downchannel_layer: Conv2d(2C, out, 1) + BN(out)
        "w_L": rnd(ks[8], (2 * C, out_ch)),
        "b_L": rnd(ks[9], (out_ch,)),
        "bn_L": {
            "gamma": 1.0 + rnd(ks[10], (out_ch,)),
            "beta": rnd(ks[11], (out_ch,)),
            "mean": rnd(ks[12], (out_ch,)),
            "var": 1.0 + jnp.abs(rnd(ks[13], (out_ch,))),
        },
        # x_downsample_layer: Conv2d(C, out, k=2, s=2); layout (kh, kw, cin, cout)
        "w_ds": rnd(ks[14], (2, 2, C, out_ch)),
        "b_ds": rnd(ks[15], (out_ch,)),
    }


# ---------------------------- plain-XLA reference ----------------------------

def reference_forward(x_nchw, params, in_ch, out_ch, eps=1e-5):
    """Straightforward XLA implementation mirroring the PyTorch module (eval-mode BN)."""
    hp = lax.Precision.HIGHEST
    x = x_nchw.astype(jnp.float32)
    a = x[:, :, 0::2, 0::2]
    b = x[:, :, 0::2, 1::2]
    c = x[:, :, 1::2, 0::2]
    d = x[:, :, 1::2, 1::2]
    yl = 0.5 * (a + b + c + d)
    yh_cat = jnp.concatenate([0.5 * (a + b - c - d),
                              0.5 * (a - b + c - d),
                              0.5 * (a - b - c + d)], axis=1)
    up = jnp.repeat(jnp.repeat(yh_cat, 2, axis=2), 2, axis=3)
    dn = ("NCHW", "HWIO", "NCHW")
    yh_conv = lax.conv_general_dilated(up, params["w_up"], (1, 1), "SAME",
                                       dimension_numbers=dn, precision=hp)
    yh_conv = yh_conv + params["b_up"][None, :, None, None]

    def bn_relu(z, p):
        s = p["gamma"] / jnp.sqrt(p["var"] + eps)
        z = (z - p["mean"][None, :, None, None]) * s[None, :, None, None]
        return jax.nn.relu(z + p["beta"][None, :, None, None])

    zH = jnp.einsum("nchw,co->nohw", jnp.concatenate([x, yh_conv], axis=1),
                    params["w_H"], precision=hp) + params["b_H"][None, :, None, None]
    x_H = bn_relu(zH, params["bn_H"])

    x_ds = lax.conv_general_dilated(x, params["w_ds"], (2, 2), "VALID",
                                    dimension_numbers=dn, precision=hp)
    x_ds = x_ds + params["b_ds"][None, :, None, None]
    zL = jnp.einsum("nchw,co->nohw", jnp.concatenate([x_ds, yl], axis=1),
                    params["w_L"], precision=hp) + params["b_L"][None, :, None, None]
    x_L = bn_relu(zL, params["bn_L"])
    return x_H, x_L


# ----------------------------------- main -------------------------------------

if __name__ == "__main__":
    in_ch, out_ch = 4, 4          # module only type-checks when out_ch == in_ch
    key = jax.random.PRNGKey(0)
    kx, kp, kx2 = jax.random.split(key, 3)
    params = init_params(kp, in_ch, out_ch)

    # primary case: N=2, C=4, 16x16 (NCHW input, like PyTorch)
    x = jax.random.normal(kx, (2, in_ch, 16, 16), jnp.float32)
    fwd = jax.jit(functools.partial(wtfd_cat_forward, in_ch=in_ch, out_ch=out_ch))
    x_H, x_L = fwd(x, params)
    jax.block_until_ready((x_H, x_L))

    assert x_H.shape == (2, out_ch, 16, 16)
    assert x_L.shape == (2, out_ch, 8, 8)
    assert bool(jnp.all(jnp.isfinite(x_H))) and bool(jnp.all(jnp.isfinite(x_L)))

    r_H, r_L = reference_forward(x, params, in_ch, out_ch)
    err = max(float(jnp.max(jnp.abs(x_H - r_H))), float(jnp.max(jnp.abs(x_L - r_L))))
    assert err < 1e-3, f"mismatch vs reference (primary): {err}"

    # secondary case: exercises cdiv/ragged row tiling (Hh=10 with th=4) and a
    # non-power-of-two width (Wh=12), N=1.
    x2 = jax.random.normal(kx2, (1, in_ch, 20, 24), jnp.float32)
    fwd2 = jax.jit(functools.partial(wtfd_cat_forward, in_ch=in_ch, out_ch=out_ch,
                                     tile_rows=4))
    x_H2, x_L2 = fwd2(x2, params)
    jax.block_until_ready((x_H2, x_L2))
    r_H2, r_L2 = reference_forward(x2, params, in_ch, out_ch)
    err2 = max(float(jnp.max(jnp.abs(x_H2 - r_H2))),
               float(jnp.max(jnp.abs(x_L2 - r_L2))))
    assert err2 < 1e-3, f"mismatch vs reference (ragged): {err2}"

    print("KERNEL_OK")
</pallas_src>

<mosaic_0001>
module attributes {stable_mosaic.version = 11 : i64} {
  func.func @wtfd_fused_kernel(%arg0: i32, %arg1: i32, %arg2: memref<1x8x16x8xf32, #tpu.memory_space<vmem>>, %arg3: memref<20x144xf32, #tpu.memory_space<vmem>>, %arg4: memref<20x1xf32, #tpu.memory_space<vmem>>, %arg5: memref<20x1xf32, #tpu.memory_space<vmem>>, %arg6: memref<1x8x20x8xf32, #tpu.memory_space<vmem>>) attributes {dimension_semantics = [#tpu.dimension_semantics<parallel>, #tpu.dimension_semantics<parallel>], iteration_bounds = array<i64: 2, 1>, scalar_prefetch = 0 : i64, scratch_operands = 0 : i64, tpu.core_type = #tpu.core_type<tc>, window_params = [{transform_indices = @transform_0, window_bounds = array<i64: 1, 8, 16, 8>}, {pipeline_mode = #tpu.pipeline_mode<synchronous>, transform_indices = @transform_1, window_bounds = array<i64: 20, 144>}, {pipeline_mode = #tpu.pipeline_mode<synchronous>, transform_indices = @transform_2, window_bounds = array<i64: 20, 1>}, {pipeline_mode = #tpu.pipeline_mode<synchronous>, transform_indices = @transform_3, window_bounds = array<i64: 20, 1>}, {transform_indices = @transform_4, window_bounds = array<i64: 1, 8, 20, 8>}]} {
    %c0 = arith.constant 0 : index
    %c0_0 = arith.constant 0 : index
    %0 = vector.load %arg3[%c0, %c0_0] : memref<20x144xf32, #tpu.memory_space<vmem>>, vector<20x144xf32>
    %c0_1 = arith.constant 0 : index
    %c0_2 = arith.constant 0 : index
    %1 = vector.load %arg4[%c0_1, %c0_2] : memref<20x1xf32, #tpu.memory_space<vmem>>, vector<20x1xf32>
    %c0_3 = arith.constant 0 : index
    %c0_4 = arith.constant 0 : index
    %2 = vector.load %arg5[%c0_3, %c0_4] : memref<20x1xf32, #tpu.memory_space<vmem>>, vector<20x1xf32>
    %cst = arith.constant 0.000000e+00 : f32
    %3 = vector.broadcast %cst : f32 to vector<16x1xf32>
    %c8_i32 = arith.constant 8 : i32
    %4 = arith.muli %arg1, %c8_i32 : i32
    %c0_i32 = arith.constant 0 : i32
    %c8_i32_5 = arith.constant 8 : i32
    %5 = arith.addi %c0_i32, %c8_i32_5 : i32
    %c1_i32 = arith.constant 1 : i32
    scf.for %arg7 = %c0_i32 to %5 step %c1_i32  : i32 {
      %6 = arith.addi %4, %arg7 : i32
      %c0_i32_7 = arith.constant 0 : i32
      %7 = arith.addi %6, %c0_i32_7 : i32
      %c1_i32_8 = arith.constant 1 : i32
      %8 = arith.subi %7, %c1_i32_8 : i32
      %c0_i32_9 = arith.constant 0 : i32
      %c7_i32 = arith.constant 7 : i32
      %9 = arith.maxsi %c0_i32_9, %8 : i32
      %10 = arith.minsi %c7_i32, %9 : i32
      %c0_10 = arith.constant 0 : index
      %11 = arith.index_cast %10 : i32 to index
      %c0_11 = arith.constant 0 : index
      %c0_12 = arith.constant 0 : index
      %12 = vector.load %arg2[%c0_10, %11, %c0_11, %c0_12] : memref<1x8x16x8xf32, #tpu.memory_space<vmem>>, vector<1x1x16x8xf32>
      %13 = vector.shape_cast %12 : vector<1x1x16x8xf32> to vector<16x8xf32>
      %c0_i32_13 = arith.constant 0 : i32
      %14 = arith.cmpi sge, %8, %c0_i32_13 : i32
      %c8_i32_14 = arith.constant 8 : i32
      %15 = arith.cmpi slt, %8, %c8_i32_14 : i32
      %16 = arith.andi %14, %15 : i1
      %cst_15 = arith.constant 0.000000e+00 : f32
      %17 = vector.broadcast %cst_15 : f32 to vector<16x8xf32>
      %18 = arith.select %16, %13, %17 : vector<16x8xf32>
      %19 = tpu.concatenate %3, %18, %3 in 1 : vector<16x1xf32>, vector<16x8xf32>, vector<16x1xf32> -> vector<16x10xf32>
      %20 = vector.extract_strided_slice %19 {offsets = [0, 0], sizes = [16, 8], strides = [1, 1]} : vector<16x10xf32> to vector<16x8xf32>
      %21 = vector.extract_strided_slice %19 {offsets = [0, 1], sizes = [16, 8], strides = [1, 1]} : vector<16x10xf32> to vector<16x8xf32>
      %22 = vector.extract_strided_slice %19 {offsets = [0, 2], sizes = [16, 8], strides = [1, 1]} : vector<16x10xf32> to vector<16x8xf32>
      %c1_i32_16 = arith.constant 1 : i32
      %23 = arith.addi %6, %c1_i32_16 : i32
      %c1_i32_17 = arith.constant 1 : i32
      %24 = arith.subi %23, %c1_i32_17 : i32
      %c0_i32_18 = arith.constant 0 : i32
      %c7_i32_19 = arith.constant 7 : i32
      %25 = arith.maxsi %c0_i32_18, %24 : i32
      %26 = arith.minsi %c7_i32_19, %25 : i32
      %c0_20 = arith.constant 0 : index
      %27 = arith.index_cast %26 : i32 to index
      %c0_21 = arith.constant 0 : index
      %c0_22 = arith.constant 0 : index
      %28 = vector.load %arg2[%c0_20, %27, %c0_21, %c0_22] : memref<1x8x16x8xf32, #tpu.memory_space<vmem>>, vector<1x1x16x8xf32>
      %29 = vector.shape_cast %28 : vector<1x1x16x8xf32> to vector<16x8xf32>
      %30 = tpu.concatenate %3, %29, %3 in 1 : vector<16x1xf32>, vector<16x8xf32>, vector<16x1xf32> -> vector<16x10xf32>
      %31 = vector.extract_strided_slice %30 {offsets = [0, 0], sizes = [16, 8], strides = [1, 1]} : vector<16x10xf32> to vector<16x8xf32>
      %32 = vector.extract_strided_slice %30 {offsets = [0, 1], sizes = [16, 8], strides = [1, 1]} : vector<16x10xf32> to vector<16x8xf32>
      %33 = vector.extract_strided_slice %30 {offsets = [0, 2], sizes = [16, 8], strides = [1, 1]} : vector<16x10xf32> to vector<16x8xf32>
      %c2_i32 = arith.constant 2 : i32
      %34 = arith.addi %6, %c2_i32 : i32
      %c1_i32_23 = arith.constant 1 : i32
      %35 = arith.subi %34, %c1_i32_23 : i32
      %c0_i32_24 = arith.constant 0 : i32
      %c7_i32_25 = arith.constant 7 : i32
      %36 = arith.maxsi %c0_i32_24, %35 : i32
      %37 = arith.minsi %c7_i32_25, %36 : i32
      %c0_26 = arith.constant 0 : index
      %38 = arith.index_cast %37 : i32 to index
      %c0_27 = arith.constant 0 : index
      %c0_28 = arith.constant 0 : index
      %39 = vector.load %arg2[%c0_26, %38, %c0_27, %c0_28] : memref<1x8x16x8xf32, #tpu.memory_space<vmem>>, vector<1x1x16x8xf32>
      %40 = vector.shape_cast %39 : vector<1x1x16x8xf32> to vector<16x8xf32>
      %c0_i32_29 = arith.constant 0 : i32
      %41 = arith.cmpi sge, %35, %c0_i32_29 : i32
      %c8_i32_30 = arith.constant 8 : i32
      %42 = arith.cmpi slt, %35, %c8_i32_30 : i32
      %43 = arith.andi %41, %42 : i1
      %cst_31 = arith.constant 0.000000e+00 : f32
      %44 = vector.broadcast %cst_31 : f32 to vector<16x8xf32>
      %45 = arith.select %43, %40, %44 : vector<16x8xf32>
      %46 = tpu.concatenate %3, %45, %3 in 1 : vector<16x1xf32>, vector<16x8xf32>, vector<16x1xf32> -> vector<16x10xf32>
      %47 = vector.extract_strided_slice %46 {offsets = [0, 0], sizes = [16, 8], strides = [1, 1]} : vector<16x10xf32> to vector<16x8xf32>
      %48 = vector.extract_strided_slice %46 {offsets = [0, 1], sizes = [16, 8], strides = [1, 1]} : vector<16x10xf32> to vector<16x8xf32>
      %49 = vector.extract_strided_slice %46 {offsets = [0, 2], sizes = [16, 8], strides = [1, 1]} : vector<16x10xf32> to vector<16x8xf32>
      %50 = tpu.concatenate %20, %21, %22, %31, %32, %33, %47, %48, %49 in 0 : vector<16x8xf32>, vector<16x8xf32>, vector<16x8xf32>, vector<16x8xf32>, vector<16x8xf32>, vector<16x8xf32>, vector<16x8xf32>, vector<16x8xf32>, vector<16x8xf32> -> vector<144x8xf32>
      %cst_32 = arith.constant dense<0.000000e+00> : vector<20x8xf32>
      %51 = tpu.matmul %0, %50, %cst_32 {dimension_numbers = #tpu.dot_dimension_numbers<[1], [0], [0], [1], [0, 0, 1, 1], [], []>, precision = #tpu.contract_precision<fp32>} : vector<20x144xf32>, vector<144x8xf32>, vector<20x8xf32> -> vector<20x8xf32>
      %52 = vector.broadcast %1 : vector<20x1xf32> to vector<20x8xf32>
      %53 = arith.mulf %51, %52 : vector<20x8xf32>
      %54 = vector.broadcast %2 : vector<20x1xf32> to vector<20x8xf32>
      %55 = arith.addf %53, %54 : vector<20x8xf32>
      %cst_33 = arith.constant 0.000000e+00 : f32
      %56 = vector.broadcast %cst_33 : f32 to vector<20x8xf32>
      %57 = arith.maximumf %55, %56 : vector<20x8xf32>
      %c0_34 = arith.constant 0 : index
      %58 = arith.index_cast %arg7 : i32 to index
      %c0_35 = arith.constant 0 : index
      %c0_36 = arith.constant 0 : index
      %59 = vector.load %arg6[%c0_34, %58, %c0_35, %c0_36] : memref<1x8x20x8xf32, #tpu.memory_space<vmem>>, vector<1x1x20x8xf32>
      %60 = vector.shape_cast %59 : vector<1x1x20x8xf32> to vector<20x8xf32>
      %61 = vector.shape_cast %57 : vector<20x8xf32> to vector<1x1x20x8xf32>
      tpu.vector_store %arg6[%c0_34, %58, %c0_35, %c0_36], %61 {strides = array<i32>} : memref<1x8x20x8xf32, #tpu.memory_space<vmem>>, vector<1x1x20x8xf32>,
    }
    %c8_i32_6 = arith.constant 8 : i32
    return
  }
  func.func @transform_0(%arg0: i32, %arg1: i32) -> (i32, i32, i32, i32) {
    %c0_i32 = arith.constant 0 : i32
    %c0_i32_0 = arith.constant 0 : i32
    %c0_i32_1 = arith.constant 0 : i32
    %c0_i32_2 = arith.constant 0 : i32
    return %arg0, %c0_i32, %c0_i32_0, %c0_i32_1 : i32, i32, i32, i32
  }
  func.func @transform_1(%arg0: i32, %arg1: i32) -> (i32, i32) {
    %c0_i32 = arith.constant 0 : i32
    %c0_i32_0 = arith.constant 0 : i32
    %c0_i32_1 = arith.constant 0 : i32
    return %c0_i32, %c0_i32_0 : i32, i32
  }
  func.func @transform_2(%arg0: i32, %arg1: i32) -> (i32, i32) {
    %c0_i32 = arith.constant 0 : i32
    %c0_i32_0 = arith.constant 0 : i32
    %c0_i32_1 = arith.constant 0 : i32
    return %c0_i32, %c0_i32_0 : i32, i32
  }
  func.func @transform_3(%arg0: i32, %arg1: i32) -> (i32, i32) {
    %c0_i32 = arith.constant 0 : i32
    %c0_i32_0 = arith.constant 0 : i32
    %c0_i32_1 = arith.constant 0 : i32
    return %c0_i32, %c0_i32_0 : i32, i32
  }
  func.func @transform_4(%arg0: i32, %arg1: i32) -> (i32, i32, i32, i32) {
    %c0_i32 = arith.constant 0 : i32
    %c0_i32_0 = arith.constant 0 : i32
    %c0_i32_1 = arith.constant 0 : i32
    return %arg0, %arg1, %c0_i32, %c0_i32_0 : i32, i32, i32, i32
  }
}

</mosaic_0001>

<llo_original>
// kernel: tile.18
$region0: #{tile.18}
  #allocation0 [shape = 's32[1]{0}', space=sflag, size = 0x4, scoped, tag = 'scoped memory for tile.18']
  %s0 = inlined_call_operand.vmem [shape: f32[4], index: 0, kind: input, shape index: {}]
  %s1 = inlined_call_operand.vmem [shape: f32[4,4], index: 1, kind: output, shape index: {}]
  // Predicated region
  $region2: #{tile.18} parent=0 // pred_check
    _
  $region3: #{tile.18} parent=0 // pred_check_branch
    %3 = sbr.rel (0) target = $region5
  $region4: #{tile.18} parent=0 // pred_region
    _
  $region5: #{tile.18} parent=0 // pred_fallthru
    _
  %v4 = vld [vmem:[%s0] ss:$0 sm:$0xff]
  %5 = vst [vmem:[%s1] sm:$0xf] %v4

// kernel: tile.19
$region0: #{tile.19}
  %s0 = inlined_call_operand.vmem [shape: f32[4,4], index: 0, kind: input, shape index: {}]
  %s1 = inlined_call_operand.vmem [shape: f32[16], index: 1, kind: output, shape index: {}]
  $region1: #{tile.19} parent=0
    #allocation0 [shape = 'u8[4096]{0}', space=vmem, size = 0x1000, scoped, tag = 'scoped mem for output reshape']
    #allocation1 [shape = 'u8[4096]{0}', space=vmem, size = 0x1000, scoped, tag = 'scoped mem for input reshape']
    %s3 = sshllo.u32 0, 4
    %v4 = vld [vmem:[%s0] sm:%s3]
    %5 = vst [vmem:[#allocation1] sm:%s3] %v4
    %v6 = vld [vmem:[#allocation1] sm:$0x1]
    %vm7 = vcmask 31744
    %8 = vst.msk [vmem:[#allocation0] sm:$0x1] %vm7, %v6
    %s9 = scalar_lea.vmem [#allocation1], 3
    %v10 = vld [vmem:[%s9] sm:$0x1]
    %11 = vrot.lane.b32.xlu0 %v10, 12
    %v12 = vpop.permute.xlu0 %11
    %vm13 = vcmask 130144
    %14 = vst.msk [vmem:[#allocation0] sm:$0x1] %vm13, %v12
    %s15 = scalar_lea.vmem [#allocation1], 2
    %v16 = vld [vmem:[%s15] sm:$0x1]
    %17 = vrot.lane.b32.xlu0 %v16, 8
    %v18 = vpop.permute.xlu0 %17
    %vm19 = vcmask 97344
    %20 = vst.msk [vmem:[#allocation0] sm:$0x1] %vm19, %v18
    %s21 = scalar_lea.vmem [#allocation1], 1
    %v22 = vld [vmem:[%s21] sm:$0x1]
    %23 = vrot.lane.b32.xlu0 %v22, 4
    %v24 = vpop.permute.xlu0 %23
    %vm25 = vcmask 64544
    %26 = vst.msk [vmem:[#allocation0] sm:$0x1] %vm25, %v24
    %s28 = sshllo.u32 0, 1
    %v30 = vld [vmem:[#allocation0] sm:%s28]
    %s31 = sshllo.u32 0, 1
    %32 = vst [vmem:[%s1] sm:%s31] %v30

// kernel: wtfd_cat_forward.1
$region0: #{wtfd_cat_forward.1}
  #allocation0 [shape = 'u32[]', space=smem, size = 0x4, offset = 0x4, fixed_abs, tag = 'smem constant byte address 0x4 - core index']
  #allocation1 [shape = 'u32[144,128]{1,0:T(1,128)}', space=vmem, size = 0x12000, scoped, tag = 'internal scratch']
  %s0 = inlined_call_operand.vmem [shape: f32[2,8,16,8], index: 0, kind: input, shape index: {}]
  %s1 = inlined_call_operand.vmem [shape: f32[20,144], index: 1, kind: input, shape index: {}]
  %s2 = inlined_call_operand.vmem [shape: f32[20,1], index: 2, kind: input, shape index: {}]
  %s3 = inlined_call_operand.vmem [shape: f32[20,1], index: 3, kind: input, shape index: {}]
  %s4 = inlined_call_operand.vmem [shape: f32[2,8,20,8], index: 4, kind: output, shape index: {}]
  %s5 = sld [smem:[#allocation0]]
  $region56: #{wtfd_cat_forward.1} parent=0
    _
  %s7 = ssub.s32 1, %s5
  %s8 = scalar_select 0, %s7, %s5
  loop: start=0, step=1, limit=4
  $region2: #{wtfd_cat_forward.1} parent=0 // loop_pre_header
    _
  $region3: #{wtfd_cat_forward.1} parent=0 // loop_header
    %s10 = sphi 0, %s14
    %p11 = scmp.ge.s32.totalorder %s10, 4
    %s17 = sphi 0, %s29
    %s18 = sphi 0, %s25
    %s19 = sphi 0, %s17
    %s20 = sphi 0, %s18
    %s21 = sphi 0, %s19
    %s22 = sphi 0, %s20
    %s32 = sphi 0, %s34
    %s35 = sphi 0, %s32
    %s36 = sphi 0, %s35
    %s52 = sphi 0, %s36
    %s56 = sphi 0, %s56
    %s58 = sphi 0, %s56
    %s59 = sphi 0, %s58
    %s73 = sphi 0, %s59
    %s77 = sphi 0, %s77
    %s79 = sphi 0, %s77
    %s80 = sphi 0, %s79
    %s94 = sphi 0, %s80
    %s98 = sphi 0, %s98
    %s100 = sphi 0, %s98
    %s101 = sphi 0, %s100
    %s115 = sphi 0, %s101
    %s123 = sphi 0, %s125
    %s126 = sphi 0, %s123
    %s127 = sphi 0, %s126
    %s143 = sphi 0, %s127
  $region4: #{wtfd_cat_forward.1} parent=0 // loop_header_branch
    %13 = sbr.rel (%p11) target = $region8
  $region5: #{wtfd_cat_forward.1} parent=0 // loop_body
    %s15 = ssub.s32 %s10, 1
    %s16 = ssub.s32 %s10, 2
    %s23 = sadd.s32 1, %s18
    %p24 = scmp.ge.s32.totalorder %s23, 1
    %s25 = scalar_select %p24, 0, %s23
    %s26 = sadd.s32 1, %s17
    %s27 = scalar_select %p24, %s26, %s17
    %p28 = scmp.ge.s32.totalorder %s27, 2
    %s29 = scalar_select %p28, 0, %s27
    %s30 = ssub.s32 %s17, %s29
    %p31 = scmp.eq.s32.totalorder %s30, 0
    %s33 = sadd.s32 %s32, 1
    %s34 = scalar_select %p31, %s32, %s33
    %p37 = pneg %p31
    %p38 = scmp.eq.s32.totalorder %s10, 1
    %p39 = por %p37, %p38
    %p40 = scmp.ne.s32.totalorder %s32, %s35
    %p41 = scmp.eq.s32.totalorder %s10, 0
    %p42 = por %p40, %p41
    %p43 = scmp.ne.s32.totalorder %s32, %s35
    %p44 = scmp.eq.s32.totalorder %s15, 1
    %p45 = por %p43, %p44
    %p46 = scmp.ne.s32.totalorder %s35, %s36
    %p47 = scmp.eq.s32.totalorder %s15, 0
    %p48 = por %p46, %p47
    %p49 = scmp.ne.s32.totalorder %s35, %s36
    %p50 = scmp.eq.s32.totalorder %s16, 1
    %p51 = por %p49, %p50
    %p53 = scmp.ne.s32.totalorder %s36, %s52
    %p54 = scmp.eq.s32.totalorder %s16, 0
    %p55 = por %p53, %p54
    %s57 = sadd.s32 %s56, 1
    %p60 = scmp.eq.s32.totalorder %s10, 1
    %p61 = scmp.ne.s32.totalorder %s56, %s58
    %p62 = scmp.eq.s32.totalorder %s10, 0
    %p63 = por %p61, %p62
    %p64 = scmp.ne.s32.totalorder %s56, %s58
    %p65 = scmp.eq.s32.totalorder %s15, 1
    %p66 = por %p64, %p65
    %p67 = scmp.ne.s32.totalorder %s58, %s59
    %p68 = scmp.eq.s32.totalorder %s15, 0
    %p69 = por %p67, %p68
    %p70 = scmp.ne.s32.totalorder %s58, %s59
    %p71 = scmp.eq.s32.totalorder %s16, 1
    %p72 = por %p70, %p71
    %p74 = scmp.ne.s32.totalorder %s59, %s73
    %p75 = scmp.eq.s32.totalorder %s16, 0
    %p76 = por %p74, %p75
    %s78 = sadd.s32 %s77, 1
    %p81 = scmp.eq.s32.totalorder %s10, 1
    %p82 = scmp.ne.s32.totalorder %s77, %s79
    %p83 = scmp.eq.s32.totalorder %s10, 0
    %p84 = por %p82, %p83
    %p85 = scmp.ne.s32.totalorder %s77, %s79
    %p86 = scmp.eq.s32.totalorder %s15, 1
    %p87 = por %p85, %p86
    %p88 = scmp.ne.s32.totalorder %s79, %s80
    %p89 = scmp.eq.s32.totalorder %s15, 0
    %p90 = por %p88, %p89
    %p91 = scmp.ne.s32.totalorder %s79, %s80
    %p92 = scmp.eq.s32.totalorder %s16, 1
    %p93 = por %p91, %p92
    %p95 = scmp.ne.s32.totalorder %s80, %s94
    %p96 = scmp.eq.s32.totalorder %s16, 0
    %p97 = por %p95, %p96
    %s99 = sadd.s32 %s98, 1
    %p102 = scmp.eq.s32.totalorder %s10, 1
    %p103 = scmp.ne.s32.totalorder %s98, %s100
    %p104 = scmp.eq.s32.totalorder %s10, 0
    %p105 = por %p103, %p104
    %p106 = scmp.ne.s32.totalorder %s98, %s100
    %p107 = scmp.eq.s32.totalorder %s15, 1
    %p108 = por %p106, %p107
    %p109 = scmp.ne.s32.totalorder %s100, %s101
    %p110 = scmp.eq.s32.totalorder %s15, 0
    %p111 = por %p109, %p110
    %p112 = scmp.ne.s32.totalorder %s100, %s101
    %p113 = scmp.eq.s32.totalorder %s16, 1
    %p114 = por %p112, %p113
    %p116 = scmp.ne.s32.totalorder %s101, %s115
    %p117 = scmp.eq.s32.totalorder %s16, 0
    %p118 = por %p116, %p117
    %s119 = ssub.s32 %s17, %s29
    %s120 = ssub.s32 %s18, %s25
    %s121 = sor.u32 %s119, %s120
    %p122 = scmp.eq.s32.totalorder %s121, 0
    %s124 = sadd.s32 %s123, 1
    %s125 = scalar_select %p122, %s123, %s124
    %p128 = pneg %p122
    %p129 = scmp.eq.s32.totalorder %s10, 1
    %p130 = por %p128, %p129
    %p131 = scmp.ne.s32.totalorder %s123, %s126
    %p132 = scmp.eq.s32.totalorder %s10, 0
    %p133 = por %p131, %p132
    %p134 = scmp.ne.s32.totalorder %s123, %s126
    %p135 = scmp.eq.s32.totalorder %s15, 1
    %p136 = por %p134, %p135
    %p137 = scmp.ne.s32.totalorder %s126, %s127
    %p138 = scmp.eq.s32.totalorder %s15, 0
    %p139 = por %p137, %p138
    %p140 = scmp.ne.s32.totalorder %s126, %s127
    %p141 = scmp.eq.s32.totalorder %s16, 1
    %p142 = por %p140, %p141
    %p144 = scmp.ne.s32.totalorder %s127, %s143
    %p145 = scmp.eq.s32.totalorder %s16, 0
    %p146 = por %p144, %p145
    %p147 = scmp.le.s32.totalorder 1, %s10
    %p148 = scmp.lt.s32.totalorder %s10, 3
    %p149 = pnand %p147, %p148
    %p150 = pneg %p149
    // Predicated region
    $region9: #{wtfd_cat_forward.1} parent=5 // pred_check
      _
    $region10: #{wtfd_cat_forward.1} parent=5 // pred_check_branch
      %152 = sbr.rel (%p149) target = $region12
    $region11: #{wtfd_cat_forward.1} parent=5 // pred_region
      %s153 = ssub.s32 %s10, 1
      // Predicated region
      $region13: #{wtfd_cat_forward.1} parent=11 // pred_check
        %p154 = pneg %p69
      $region14: #{wtfd_cat_forward.1} parent=11 // pred_check_branch
        %156 = sbr.rel (%p154) target = $region16
      $region15: #{wtfd_cat_forward.1} parent=11 // pred_region
        _
      $region16: #{wtfd_cat_forward.1} parent=11 // pred_fallthru
        _
      // Predicated region
      $region17: #{wtfd_cat_forward.1} parent=11 // pred_check
        %p157 = pneg %p90
      $region18: #{wtfd_cat_forward.1} parent=11 // pred_check_branch
        %159 = sbr.rel (%p157) target = $region20
      $region19: #{wtfd_cat_forward.1} parent=11 // pred_region
        _
      $region20: #{wtfd_cat_forward.1} parent=11 // pred_fallthru
        _
      // Predicated region
      $region21: #{wtfd_cat_forward.1} parent=11 // pred_check
        %p160 = pneg %p111
      $region22: #{wtfd_cat_forward.1} parent=11 // pred_check_branch
        %162 = sbr.rel (%p160) target = $region24
      $region23: #{wtfd_cat_forward.1} parent=11 // pred_region
        _
      $region24: #{wtfd_cat_forward.1} parent=11 // pred_fallthru
        _
    $region12: #{wtfd_cat_forward.1} parent=5 // pred_fallthru
      _
    %p163 = scmp.lt.s32.totalorder %s10, 2
    // Predicated region
    $region25: #{wtfd_cat_forward.1} parent=5 // pred_check
      %p164 = pneg %p163
    $region26: #{wtfd_cat_forward.1} parent=5 // pred_check_branch
      %166 = sbr.rel (%p164) target = $region28
    $region27: #{wtfd_cat_forward.1} parent=5 // pred_region
      // Predicated region
      $region29: #{wtfd_cat_forward.1} parent=27 // pred_check
        %p167 = pneg %p42
      $region30: #{wtfd_cat_forward.1} parent=27 // pred_check_branch
        %169 = sbr.rel (%p167) target = $region32
      $region31: #{wtfd_cat_forward.1} parent=27 // pred_region
        %p170 = scmp.lt.s32.totalorder %s17, 1
        %s171 = scalar_select %p170, %s17, 1
        %s172 = smul.addr %s171, 16
        %s173 = smul.addr %s172, 8
        %s174 = scalar_lea.vmem %s0, %s173
      $region32: #{wtfd_cat_forward.1} parent=27 // pred_fallthru
        _
    $region28: #{wtfd_cat_forward.1} parent=5 // pred_fallthru
      _
    %p175 = scmp.le.s32.totalorder 1, %s10
    %p176 = scmp.lt.s32.totalorder %s10, 3
    %p177 = pnand %p175, %p176
    %p178 = pneg %p177
    // Predicated region
    $region33: #{wtfd_cat_forward.1} parent=5 // pred_check
      _
    $region34: #{wtfd_cat_forward.1} parent=5 // pred_check_branch
      %180 = sbr.rel (%p177) target = $region36
    $region35: #{wtfd_cat_forward.1} parent=5 // pred_region
      %s181 = ssub.s32 %s10, 1
      %p182 = scmp.lt.s32.totalorder %s19, 1
      %s183 = scalar_select %p182, %s19, 1
      %s184 = smul.addr %s183, 16
      %s185 = smul.addr %s184, 8
      %s186 = scalar_lea.vmem %s0, %s185
      %p187 = pneg %p48
      %p188 = pneg %p45
      %p189 = pneg %p69
      %p190 = pneg %p66
      %p191 = pneg %p90
      %p192 = pneg %p87
      %p193 = pneg %p111
      %p194 = pneg %p108
      %p195 = pneg %p139
      %p196 = pneg %p136
      %s197 = smul.u32 8, %s20
      %p198 = scmp.lt.s32.totalorder %s19, 1
      %s199 = scalar_select %p198, %s19, 1
      %p200 = scmp.lt.s32.totalorder %s197, 7
      %s201 = scalar_select %p200, %s197, 7
      %s202 = smul.addr %s201, 3
      %s203 = smul.addr %s199, 24
      %s204 = sadd.s32 %s202, %s203
      %s205 = smul.addr %s204, 8
      %s206 = scalar_lea.vmem %s4, %s205
      %p207 = scmp.lt.s32.totalorder %s19, 1
      %s208 = scalar_select %p207, %s19, 1
      %s209 = smul.addr %s208, 16
      %s210 = smul.addr %s209, 8
      %s211 = scalar_lea.vmem %s0, %s210
      %s212 = smul.u32 8, %s20
      %p213 = scmp.lt.s32.totalorder %s19, 1
      %s214 = scalar_select %p213, %s19, 1
      %p215 = scmp.lt.s32.totalorder %s212, 7
      %s216 = scalar_select %p215, %s212, 7
      %s217 = smul.addr %s216, 3
      %s218 = smul.addr %s214, 24
      %s219 = sadd.s32 %s217, %s218
      %s220 = smul.addr %s219, 8
      %s221 = scalar_lea.vmem %s4, %s220
      %s222 = smul.u32 8, %s20
      %v223 = vld [vmem:[%s1] sm:$0xff]
      %v224 = vld [vmem:[%s1 + $0x8] sm:$0xff]
      %v225 = vld [vmem:[%s1 + $0x10] sm:$0xff]
      %v226 = vld [vmem:[%s1 + $0x18] sm:$0xff]
      %v227 = vld [vmem:[%s1 + $0x20] sm:$0xf]
      %v228 = vld [vmem:[%s1 + $0x28] sm:$0xf]
      %v229 = vld [vmem:[%s2] sm:$0xff]
      %v230 = vld [vmem:[%s2 + $0x8] sm:$0xff]
      %v231 = vld [vmem:[%s2 + $0x10] sm:$0xf]
      %v232 = vld [vmem:[%s3] sm:$0xff]
      %v233 = vld [vmem:[%s3 + $0x8] sm:$0xff]
      %v234 = vld [vmem:[%s3 + $0x10] sm:$0xf]
      %s235 = smul.u32 %s20, 8
      loop: start=0, step=1, limit=8
      $region37: #{wtfd_cat_forward.1} parent=35 // loop_pre_header
        _
      $region38: #{wtfd_cat_forward.1} parent=35 // loop_header
        %s237 = sphi 0, %s241
        %p238 = scmp.ge.s32.totalorder %s237, 8
      $region39: #{wtfd_cat_forward.1} parent=35 // loop_header_branch
        %240 = sbr.rel (%p238) target = $region43
      $region40: #{wtfd_cat_forward.1} parent=35 // loop_body
        %s242 = sadd.s32 %s235, %s237
        %s243 = sadd.s32 %s242, 4294967295
        %p244 = scmp.gt.s32.totalorder %s243, 0
        %s245 = scalar_select %p244, %s243, 0
        %p246 = scmp.lt.s32.totalorder %s245, 7
        %s247 = scalar_select %p246, %s245, 7
        %s248 = smul.u32 %s247, 16
        %s249 = scalar_lea.vmem %s211, %s248
        %v250 = vld [vmem:[%s249] sm:$0xff]
        %v251 = vld [vmem:[%s249 + $0x8] sm:$0xff]
        %p252 = scmp.ge.s32.totalorder %s243, 0
        %p253 = scmp.lt.s32.totalorder %s243, 8
        %p254 = pnand %p252, %p253
        %p255 = pneg %p254
        %s256 = scalar_select %p255, 1, 0
        %v257 = vstv %s256
        %vm258 = vcmp.eq.s32.totalorder %v257, 1
        %v259 = vsel %vm258, %v250, 0.0
        %v260 = vsel %vm258, %v251, 0.0
        %263 = vrot.lane.b32.xlu0 %v259, 1
        %v264 = vpop.permute.xlu0 %263
        %265 = vrot.lane.b32.xlu0 %v260, 1
        %v266 = vpop.permute.xlu0 %265
        %vm269 = vcmask 7168
        %v270 = vsel %vm269, 0.0, %v264
        %v271 = vsel %vm269, 0.0, %v266
        %vm272 = vcmask 72704
        %v273 = vsel %vm272, %v270, 0.0
        %v274 = vsel %vm272, %v271, 0.0
        %p275 = scmp.gt.s32.totalorder %s242, 0
        %s276 = scalar_select %p275, %s242, 0
        %p277 = scmp.lt.s32.totalorder %s276, 7
        %s278 = scalar_select %p277, %s276, 7
        %s279 = smul.u32 %s278, 16
        %s280 = scalar_lea.vmem %s211, %s279
        %v281 = vld [vmem:[%s280] sm:$0xff]
        %v282 = vld [vmem:[%s280 + $0x8] sm:$0xff]
        %285 = vrot.lane.b32.xlu0 %v281, 1
        %v286 = vpop.permute.xlu0 %285
        %287 = vrot.lane.b32.xlu0 %v282, 1
        %v288 = vpop.permute.xlu0 %287
        %v291 = vsel %vm269, 0.0, %v286
        %v292 = vsel %vm269, 0.0, %v288
        %v293 = vsel %vm272, %v291, 0.0
        %v294 = vsel %vm272, %v292, 0.0
        %s295 = sadd.s32 %s242, 1
        %p296 = scmp.gt.s32.totalorder %s295, 0
        %s297 = scalar_select %p296, %s295, 0
        %p298 = scmp.lt.s32.totalorder %s297, 7
        %s299 = scalar_select %p298, %s297, 7
        %s300 = smul.u32 %s299, 16
        %s301 = scalar_lea.vmem %s211, %s300
        %v302 = vld [vmem:[%s301] sm:$0xff]
        %v303 = vld [vmem:[%s301 + $0x8] sm:$0xff]
        %p304 = scmp.ge.s32.totalorder %s295, 0
        %p305 = scmp.lt.s32.totalorder %s295, 8
        %p306 = pnand %p304, %p305
        %p307 = pneg %p306
        %s308 = scalar_select %p307, 1, 0
        %v309 = vstv %s308
        %vm310 = vcmp.eq.s32.totalorder %v309, 1
        %v311 = vsel %vm310, %v302, 0.0
        %v312 = vsel %vm310, %v303, 0.0
        %315 = vrot.lane.b32.xlu0 %v311, 1
        %v316 = vpop.permute.xlu0 %315
        %317 = vrot.lane.b32.xlu0 %v312, 1
        %v318 = vpop.permute.xlu0 %317
        %v321 = vsel %vm269, 0.0, %v316
        %v322 = vsel %vm269, 0.0, %v318
        %v323 = vsel %vm272, %v321, 0.0
        %v324 = vsel %vm272, %v322, 0.0
        %327 = vrot.lane.b32.xlu0 %v273, 127
        %v328 = vpop.permute.xlu0 %327
        %329 = vrot.lane.b32.xlu0 %v274, 127
        %v330 = vpop.permute.xlu0 %329
        %333 = vrot.lane.b32.xlu0 %v273, 126
        %v334 = vpop.permute.xlu0 %333
        %335 = vrot.lane.b32.xlu0 %v274, 126
        %v336 = vpop.permute.xlu0 %335
        %341 = vrot.lane.b32.xlu0 %v293, 127
        %v342 = vpop.permute.xlu0 %341
        %343 = vrot.lane.b32.xlu0 %v294, 127
        %v344 = vpop.permute.xlu0 %343
        %347 = vrot.lane.b32.xlu0 %v293, 126
        %v348 = vpop.permute.xlu0 %347
        %349 = vrot.lane.b32.xlu0 %v294, 126
        %v350 = vpop.permute.xlu0 %349
        %355 = vrot.lane.b32.xlu0 %v323, 127
        %v356 = vpop.permute.xlu0 %355
        %357 = vrot.lane.b32.xlu0 %v324, 127
        %v358 = vpop.permute.xlu0 %357
        %361 = vrot.lane.b32.xlu0 %v323, 126
        %v362 = vpop.permute.xlu0 %361
        %363 = vrot.lane.b32.xlu0 %v324, 126
        %v364 = vpop.permute.xlu0 %363
        %vm367 = vcmask 130048
        %v369 = vsel %vm367, %v224, 0
        %v372 = vsel %vm367, %v226, 0
        %v375 = vsel %vm367, %v228, 0
        %377 = vmatprep.subr.mxu0 0.0
        %v378 = vand.u32 %v273, 4294901760
        %379 = vmatpush1.msra.mxu0 %v378
        %380 = vmatprep.subr.mxu0 0.0
        %v381 = vand.u32 %v274, 4294901760
        %382 = vmatpush1.msra.mxu0 %v381
        %383 = vmatprep.subr.mxu0 0.0
        %v384 = vand.u32 %v328, 4294901760
        %385 = vmatpush1.msra.mxu0 %v384
        %386 = vmatprep.subr.mxu0 0.0
        %v387 = vand.u32 %v330, 4294901760
        %388 = vmatpush1.msra.mxu0 %v387
        %389 = vmatprep.subr.mxu0 0.0
        %v390 = vand.u32 %v334, 4294901760
        %391 = vmatpush1.msra.mxu0 %v390
        %392 = vmatprep.subr.mxu0 0.0
        %v393 = vand.u32 %v336, 4294901760
        %394 = vmatpush1.msra.mxu0 %v393
        %395 = vmatprep.subr.mxu0 0.0
        %v396 = vand.u32 %v293, 4294901760
        %397 = vmatpush1.msra.mxu0 %v396
        %398 = vmatprep.subr.mxu0 0.0
        %v399 = vand.u32 %v294, 4294901760
        %400 = vmatpush1.msra.mxu0 %v399
        %401 = vmatprep.subr.mxu0 0.0
        %v402 = vand.u32 %v342, 4294901760
        %403 = vmatpush1.msra.mxu0 %v402
        %404 = vmatprep.subr.mxu0 0.0
        %v405 = vand.u32 %v344, 4294901760
        %406 = vmatpush1.msra.mxu0 %v405
        %407 = vmatprep.subr.mxu0 0.0
        %v408 = vand.u32 %v348, 4294901760
        %409 = vmatpush1.msra.mxu0 %v408
        %410 = vmatprep.subr.mxu0 0.0
        %v411 = vand.u32 %v350, 4294901760
        %412 = vmatpush1.msra.mxu0 %v411
        %413 = vmatprep.subr.mxu0 0.0
        %v414 = vand.u32 %v323, 4294901760
        %415 = vmatpush1.msra.mxu0 %v414
        %416 = vmatprep.subr.mxu0 0.0
        %v417 = vand.u32 %v324, 4294901760
        %418 = vmatpush1.msra.mxu0 %v417
        %419 = vmatprep.subr.mxu0 0.0
        %v420 = vand.u32 %v356, 4294901760
        %421 = vmatpush1.msra.mxu0 %v420
        %422 = vmatprep.subr.mxu0 0.0
        %v423 = vand.u32 %v358, 4294901760
        %424 = vmatpush1.msra.mxu0 %v423
        %425 = vmatprep.subr.mxu0 0.0
        %v426 = vand.u32 %v362, 4294901760
        %427 = vmatpush1.msra.mxu0 %v426
        %428 = vmatprep.subr.mxu0 0.0
        %v429 = vand.u32 %v364, 4294901760
        %430 = vmatpush1.msra.mxu0 %v429
        %431 = vmatprep.subr.mxu0 0.0
        %432 = vmatpush1.msra.mxu0 0.0
        %433 = vmatprep.subr.mxu0 0.0
        %434 = vmatpush1.msra.mxu0 0.0
        %435 = vmatprep.subr.mxu0 0.0
        %436 = vmatpush1.msra.mxu0 0.0
        %437 = vmatprep.subr.mxu0 0.0
        %438 = vmatpush1.msra.mxu0 0.0
        %439 = vmatprep.subr.mxu0 0.0
        %440 = vmatpush1.msra.mxu0 0.0
        %441 = vmatprep.subr.mxu0 0.0
        %442 = vmatpush1.msra.mxu0 0.0
        %443 = vmatprep.subr.mxu0 0.0
        %444 = vmatpush1.msra.mxu0 0.0
        %445 = vmatprep.subr.mxu0 0.0
        %446 = vmatpush1.msra.mxu0 0.0
        %447 = vmatprep.subr.mxu0 0.0
        %448 = vmatpush1.msra.mxu0 0.0
        %449 = vmatprep.subr.mxu0 0.0
        %450 = vmatpush1.msra.mxu0 0.0
        %451 = vmatprep.subr.mxu0 0.0
        %452 = vmatpush1.msra.mxu0 0.0
        %453 = vmatprep.subr.mxu0 0.0
        %454 = vmatpush1.msra.mxu0 0.0
        %455 = vmatprep.subr.mxu0 0.0
        %456 = vmatpush1.msra.mxu0 0.0
        %457 = vmatprep.subr.mxu0 0.0
        %458 = vmatpush1.msra.mxu0 0.0
        %v459 = vand.u32 %v369, 4294901760
        %v460 = vsub.f32 %v369, %v459
        %v461 = vand.u32 %v460, 4294901760
        %v462 = vsub.f32 %v460, %v461
        %v463 = vand.u32 %v462, 4294901760
        %464 = vmatprep.mubr.f32.mxu0 %v463
        %v465 = vand.u32 %v223, 4294901760
        %v466 = vsub.f32 %v223, %v465
        %v467 = vand.u32 %v466, 4294901760
        %v468 = vsub.f32 %v466, %v467
        %v469 = vand.u32 %v468, 4294901760
        %470 = vmatmul.mubr.f32.gmra.mrb[0].mxu0 %v469
        %v471 = vpop.f32.mrb[0].mxu0
        %v472 = vadd.f32 0.0, %v471
        %v473 = vpop.f32.mrb[0].mxu0
        %v474 = vand.u32 %v372, 4294901760
        %v475 = vsub.f32 %v372, %v474
        %v476 = vand.u32 %v475, 4294901760
        %v477 = vsub.f32 %v475, %v476
        %v478 = vand.u32 %v477, 4294901760
        %479 = vmatprep.mubr.f32.mxu0 %v478
        %v480 = vand.u32 %v225, 4294901760
        %v481 = vsub.f32 %v225, %v480
        %v482 = vand.u32 %v481, 4294901760
        %v483 = vsub.f32 %v481, %v482
        %v484 = vand.u32 %v483, 4294901760
        %485 = vmatmul.mubr.f32.gmra.mrb[0].mxu0 %v484
        %v486 = vpop.f32.mrb[0].mxu0
        %v487 = vadd.f32 0.0, %v486
        %v488 = vpop.f32.mrb[0].mxu0
        %v489 = vand.u32 %v375, 4294901760
        %v490 = vsub.f32 %v375, %v489
        %v491 = vand.u32 %v490, 4294901760
        %v492 = vsub.f32 %v490, %v491
        %v493 = vand.u32 %v492, 4294901760
        %494 = vmatprep.mubr.f32.mxu0 %v493
        %v495 = vand.u32 %v227, 4294901760
        %v496 = vsub.f32 %v227, %v495
        %v497 = vand.u32 %v496, 4294901760
        %v498 = vsub.f32 %v496, %v497
        %v499 = vand.u32 %v498, 4294901760
        %500 = vmatmul.mubr.f32.gmra.mrb[0].mxu0 %v499
        %v501 = vpop.f32.mrb[0].mxu0
        %v502 = vadd.f32 0.0, %v501
        %v503 = vpop.f32.mrb[0].mxu0
        %504 = vdwg.mxu0
        %505 = vmatprep.subr.mxu0 0.0
        %v506 = vand.u32 %v273, 4294901760
        %v507 = vsub.f32 %v273, %v506
        %v508 = vand.u32 %v507, 4294901760
        %v509 = vsub.f32 %v507, %v508
        %v510 = vand.u32 %v509, 4294901760
        %511 = vmatpush1.msra.mxu0 %v510
        %512 = vmatprep.subr.mxu0 0.0
        %v513 = vand.u32 %v274, 4294901760
        %v514 = vsub.f32 %v274, %v513
        %v515 = vand.u32 %v514, 4294901760
        %v516 = vsub.f32 %v514, %v515
        %v517 = vand.u32 %v516, 4294901760
        %518 = vmatpush1.msra.mxu0 %v517
        %519 = vmatprep.subr.mxu0 0.0
        %v520 = vand.u32 %v328, 4294901760
        %v521 = vsub.f32 %v328, %v520
        %v522 = vand.u32 %v521, 4294901760
        %v523 = vsub.f32 %v521, %v522
        %v524 = vand.u32 %v523, 4294901760
        %525 = vmatpush1.msra.mxu0 %v524
        %526 = vmatprep.subr.mxu0 0.0
        %v527 = vand.u32 %v330, 4294901760
        %v528 = vsub.f32 %v330, %v527
        %v529 = vand.u32 %v528, 4294901760
        %v530 = vsub.f32 %v528, %v529
        %v531 = vand.u32 %v530, 4294901760
        %532 = vmatpush1.msra.mxu0 %v531
        %533 = vmatprep.subr.mxu0 0.0
        %v534 = vand.u32 %v334, 4294901760
        %v535 = vsub.f32 %v334, %v534
        %v536 = vand.u32 %v535, 4294901760
        %v537 = vsub.f32 %v535, %v536
        %v538 = vand.u32 %v537, 4294901760
        %539 = vmatpush1.msra.mxu0 %v538
        %540 = vmatprep.subr.mxu0 0.0
        %v541 = vand.u32 %v336, 4294901760
        %v542 = vsub.f32 %v336, %v541
        %v543 = vand.u32 %v542, 4294901760
        %v544 = vsub.f32 %v542, %v543
        %v545 = vand.u32 %v544, 4294901760
        %546 = vmatpush1.msra.mxu0 %v545
        %547 = vmatprep.subr.mxu0 0.0
        %v548 = vand.u32 %v293, 4294901760
        %v549 = vsub.f32 %v293, %v548
        %v550 = vand.u32 %v549, 4294901760
        %v551 = vsub.f32 %v549, %v550
        %v552 = vand.u32 %v551, 4294901760
        %553 = vmatpush1.msra.mxu0 %v552
        %554 = vmatprep.subr.mxu0 0.0
        %v555 = vand.u32 %v294, 4294901760
        %v556 = vsub.f32 %v294, %v555
        %v557 = vand.u32 %v556, 4294901760
        %v558 = vsub.f32 %v556, %v557
        %v559 = vand.u32 %v558, 4294901760
        %560 = vmatpush1.msra.mxu0 %v559
        %561 = vmatprep.subr.mxu0 0.0
        %v562 = vand.u32 %v342, 4294901760
        %v563 = vsub.f32 %v342, %v562
        %v564 = vand.u32 %v563, 4294901760
        %v565 = vsub.f32 %v563, %v564
        %v566 = vand.u32 %v565, 4294901760
        %567 = vmatpush1.msra.mxu0 %v566
        %568 = vmatprep.subr.mxu0 0.0
        %v569 = vand.u32 %v344, 4294901760
        %v570 = vsub.f32 %v344, %v569
        %v571 = vand.u32 %v570, 4294901760
        %v572 = vsub.f32 %v570, %v571
        %v573 = vand.u32 %v572, 4294901760
        %574 = vmatpush1.msra.mxu0 %v573
        %575 = vmatprep.subr.mxu0 0.0
        %v576 = vand.u32 %v348, 4294901760
        %v577 = vsub.f32 %v348, %v576
        %v578 = vand.u32 %v577, 4294901760
        %v579 = vsub.f32 %v577, %v578
        %v580 = vand.u32 %v579, 4294901760
        %581 = vmatpush1.msra.mxu0 %v580
        %582 = vmatprep.subr.mxu0 0.0
        %v583 = vand.u32 %v350, 4294901760
        %v584 = vsub.f32 %v350, %v583
        %v585 = vand.u32 %v584, 4294901760
        %v586 = vsub.f32 %v584, %v585
        %v587 = vand.u32 %v586, 4294901760
        %588 = vmatpush1.msra.mxu0 %v587
        %589 = vmatprep.subr.mxu0 0.0
        %v590 = vand.u32 %v323, 4294901760
        %v591 = vsub.f32 %v323, %v590
        %v592 = vand.u32 %v591, 4294901760
        %v593 = vsub.f32 %v591, %v592
        %v594 = vand.u32 %v593, 4294901760
        %595 = vmatpush1.msra.mxu0 %v594
        %596 = vmatprep.subr.mxu0 0.0
        %v597 = vand.u32 %v324, 4294901760
        %v598 = vsub.f32 %v324, %v597
        %v599 = vand.u32 %v598, 4294901760
        %v600 = vsub.f32 %v598, %v599
        %v601 = vand.u32 %v600, 4294901760
        %602 = vmatpush1.msra.mxu0 %v601
        %603 = vmatprep.subr.mxu0 0.0
        %v604 = vand.u32 %v356, 4294901760
        %v605 = vsub.f32 %v356, %v604
        %v606 = vand.u32 %v605, 4294901760
        %v607 = vsub.f32 %v605, %v606
        %v608 = vand.u32 %v607, 4294901760
        %609 = vmatpush1.msra.mxu0 %v608
        %610 = vmatprep.subr.mxu0 0.0
        %v611 = vand.u32 %v358, 4294901760
        %v612 = vsub.f32 %v358, %v611
        %v613 = vand.u32 %v612, 4294901760
        %v614 = vsub.f32 %v612, %v613
        %v615 = vand.u32 %v614, 4294901760
        %616 = vmatpush1.msra.mxu0 %v615
        %617 = vmatprep.subr.mxu0 0.0
        %v618 = vand.u32 %v362, 4294901760
        %v619 = vsub.f32 %v362, %v618
        %v620 = vand.u32 %v619, 4294901760
        %v621 = vsub.f32 %v619, %v620
        %v622 = vand.u32 %v621, 4294901760
        %623 = vmatpush1.msra.mxu0 %v622
        %624 = vmatprep.subr.mxu0 0.0
        %v625 = vand.u32 %v364, 4294901760
        %v626 = vsub.f32 %v364, %v625
        %v627 = vand.u32 %v626, 4294901760
        %v628 = vsub.f32 %v626, %v627
        %v629 = vand.u32 %v628, 4294901760
        %630 = vmatpush1.msra.mxu0 %v629
        %631 = vmatprep.subr.mxu0 0.0
        %632 = vmatpush1.msra.mxu0 0.0
        %633 = vmatprep.subr.mxu0 0.0
        %634 = vmatpush1.msra.mxu0 0.0
        %635 = vmatprep.subr.mxu0 0.0
        %636 = vmatpush1.msra.mxu0 0.0
        %637 = vmatprep.subr.mxu0 0.0
        %638 = vmatpush1.msra.mxu0 0.0
        %639 = vmatprep.subr.mxu0 0.0
        %640 = vmatpush1.msra.mxu0 0.0
        %641 = vmatprep.subr.mxu0 0.0
        %642 = vmatpush1.msra.mxu0 0.0
        %643 = vmatprep.subr.mxu0 0.0
        %644 = vmatpush1.msra.mxu0 0.0
        %645 = vmatprep.subr.mxu0 0.0
        %646 = vmatpush1.msra.mxu0 0.0
        %647 = vmatprep.subr.mxu0 0.0
        %648 = vmatpush1.msra.mxu0 0.0
        %649 = vmatprep.subr.mxu0 0.0
        %650 = vmatpush1.msra.mxu0 0.0
        %651 = vmatprep.subr.mxu0 0.0
        %652 = vmatpush1.msra.mxu0 0.0
        %653 = vmatprep.subr.mxu0 0.0
        %654 = vmatpush1.msra.mxu0 0.0
        %655 = vmatprep.subr.mxu0 0.0
        %656 = vmatpush1.msra.mxu0 0.0
        %657 = vmatprep.subr.mxu0 0.0
        %658 = vmatpush1.msra.mxu0 0.0
        %v659 = vand.u32 %v369, 4294901760
        %660 = vmatprep.mubr.f32.mxu0 %v659
        %v661 = vand.u32 %v223, 4294901760
        %662 = vmatmul.mubr.f32.gmra.mrb[0].mxu0 %v661
        %v663 = vpop.f32.mrb[0].mxu0
        %v664 = vadd.f32 %v472, %v663
        %v665 = vpop.f32.mrb[0].mxu0
        %v666 = vand.u32 %v372, 4294901760
        %667 = vmatprep.mubr.f32.mxu0 %v666
        %v668 = vand.u32 %v225, 4294901760
        %669 = vmatmul.mubr.f32.gmra.mrb[0].mxu0 %v668
        %v670 = vpop.f32.mrb[0].mxu0
        %v671 = vadd.f32 %v487, %v670
        %v672 = vpop.f32.mrb[0].mxu0
        %v673 = vand.u32 %v375, 4294901760
        %674 = vmatprep.mubr.f32.mxu0 %v673
        %v675 = vand.u32 %v227, 4294901760
        %676 = vmatmul.mubr.f32.gmra.mrb[0].mxu0 %v675
        %v677 = vpop.f32.mrb[0].mxu0
        %v678 = vadd.f32 %v502, %v677
        %v679 = vpop.f32.mrb[0].mxu0
        %680 = vdwg.mxu0
        %681 = vmatprep.subr.mxu0 0.0
        %v682 = vand.u32 %v273, 4294901760
        %v683 = vsub.f32 %v273, %v682
        %684 = vmatpush1.msra.mxu0 %v683
        %685 = vmatprep.subr.mxu0 0.0
        %v686 = vand.u32 %v274, 4294901760
        %v687 = vsub.f32 %v274, %v686
        %688 = vmatpush1.msra.mxu0 %v687
        %689 = vmatprep.subr.mxu0 0.0
        %v690 = vand.u32 %v328, 4294901760
        %v691 = vsub.f32 %v328, %v690
        %692 = vmatpush1.msra.mxu0 %v691
        %693 = vmatprep.subr.mxu0 0.0
        %v694 = vand.u32 %v330, 4294901760
        %v695 = vsub.f32 %v330, %v694
        %696 = vmatpush1.msra.mxu0 %v695
        %697 = vmatprep.subr.mxu0 0.0
        %v698 = vand.u32 %v334, 4294901760
        %v699 = vsub.f32 %v334, %v698
        %700 = vmatpush1.msra.mxu0 %v699
        %701 = vmatprep.subr.mxu0 0.0
        %v702 = vand.u32 %v336, 4294901760
        %v703 = vsub.f32 %v336, %v702
        %704 = vmatpush1.msra.mxu0 %v703
        %705 = vmatprep.subr.mxu0 0.0
        %v706 = vand.u32 %v293, 4294901760
        %v707 = vsub.f32 %v293, %v706
        %708 = vmatpush1.msra.mxu0 %v707
        %709 = vmatprep.subr.mxu0 0.0
        %v710 = vand.u32 %v294, 4294901760
        %v711 = vsub.f32 %v294, %v710
        %712 = vmatpush1.msra.mxu0 %v711
        %713 = vmatprep.subr.mxu0 0.0
        %v714 = vand.u32 %v342, 4294901760
        %v715 = vsub.f32 %v342, %v714
        %716 = vmatpush1.msra.mxu0 %v715
        %717 = vmatprep.subr.mxu0 0.0
        %v718 = vand.u32 %v344, 4294901760
        %v719 = vsub.f32 %v344, %v718
        %720 = vmatpush1.msra.mxu0 %v719
        %721 = vmatprep.subr.mxu0 0.0
        %v722 = vand.u32 %v348, 4294901760
        %v723 = vsub.f32 %v348, %v722
        %724 = vmatpush1.msra.mxu0 %v723
        %725 = vmatprep.subr.mxu0 0.0
        %v726 = vand.u32 %v350, 4294901760
        %v727 = vsub.f32 %v350, %v726
        %728 = vmatpush1.msra.mxu0 %v727
        %729 = vmatprep.subr.mxu0 0.0
        %v730 = vand.u32 %v323, 4294901760
        %v731 = vsub.f32 %v323, %v730
        %732 = vmatpush1.msra.mxu0 %v731
        %733 = vmatprep.subr.mxu0 0.0
        %v734 = vand.u32 %v324, 4294901760
        %v735 = vsub.f32 %v324, %v734
        %736 = vmatpush1.msra.mxu0 %v735
        %737 = vmatprep.subr.mxu0 0.0
        %v738 = vand.u32 %v356, 4294901760
        %v739 = vsub.f32 %v356, %v738
        %740 = vmatpush1.msra.mxu0 %v739
        %741 = vmatprep.subr.mxu0 0.0
        %v742 = vand.u32 %v358, 4294901760
        %v743 = vsub.f32 %v358, %v742
        %744 = vmatpush1.msra.mxu0 %v743
        %745 = vmatprep.subr.mxu0 0.0
        %v746 = vand.u32 %v362, 4294901760
        %v747 = vsub.f32 %v362, %v746
        %748 = vmatpush1.msra.mxu0 %v747
        %749 = vmatprep.subr.mxu0 0.0
        %v750 = vand.u32 %v364, 4294901760
        %v751 = vsub.f32 %v364, %v750
        %752 = vmatpush1.msra.mxu0 %v751
        %753 = vmatprep.subr.mxu0 0.0
        %754 = vmatpush1.msra.mxu0 0.0
        %755 = vmatprep.subr.mxu0 0.0
        %756 = vmatpush1.msra.mxu0 0.0
        %757 = vmatprep.subr.mxu0 0.0
        %758 = vmatpush1.msra.mxu0 0.0
        %759 = vmatprep.subr.mxu0 0.0
        %760 = vmatpush1.msra.mxu0 0.0
        %761 = vmatprep.subr.mxu0 0.0
        %762 = vmatpush1.msra.mxu0 0.0
        %763 = vmatprep.subr.mxu0 0.0
        %764 = vmatpush1.msra.mxu0 0.0
        %765 = vmatprep.subr.mxu0 0.0
        %766 = vmatpush1.msra.mxu0 0.0
        %767 = vmatprep.subr.mxu0 0.0
        %768 = vmatpush1.msra.mxu0 0.0
        %769 = vmatprep.subr.mxu0 0.0
        %770 = vmatpush1.msra.mxu0 0.0
        %771 = vmatprep.subr.mxu0 0.0
        %772 = vmatpush1.msra.mxu0 0.0
        %773 = vmatprep.subr.mxu0 0.0
        %774 = vmatpush1.msra.mxu0 0.0
        %775 = vmatprep.subr.mxu0 0.0
        %776 = vmatpush1.msra.mxu0 0.0
        %777 = vmatprep.subr.mxu0 0.0
        %778 = vmatpush1.msra.mxu0 0.0
        %779 = vmatprep.subr.mxu0 0.0
        %780 = vmatpush1.msra.mxu0 0.0
        %v781 = vand.u32 %v369, 4294901760
        %v782 = vsub.f32 %v369, %v781
        %783 = vmatprep.mubr.f32.mxu0 %v782
        %v784 = vand.u32 %v223, 4294901760
        %v785 = vsub.f32 %v223, %v784
        %786 = vmatmul.mubr.f32.gmra.mrb[0].mxu0 %v785
        %v787 = vpop.f32.mrb[0].mxu0
        %v788 = vadd.f32 %v664, %v787
        %v789 = vpop.f32.mrb[0].mxu0
        %v790 = vand.u32 %v372, 4294901760
        %v791 = vsub.f32 %v372, %v790
        %792 = vmatprep.mubr.f32.mxu0 %v791
        %v793 = vand.u32 %v225, 4294901760
        %v794 = vsub.f32 %v225, %v793
        %795 = vmatmul.mubr.f32.gmra.mrb[0].mxu0 %v794
        %v796 = vpop.f32.mrb[0].mxu0
        %v797 = vadd.f32 %v671, %v796
        %v798 = vpop.f32.mrb[0].mxu0
        %v799 = vand.u32 %v375, 4294901760
        %v800 = vsub.f32 %v375, %v799
        %801 = vmatprep.mubr.f32.mxu0 %v800
        %v802 = vand.u32 %v227, 4294901760
        %v803 = vsub.f32 %v227, %v802
        %804 = vmatmul.mubr.f32.gmra.mrb[0].mxu0 %v803
        %v805 = vpop.f32.mrb[0].mxu0
        %v806 = vadd.f32 %v678, %v805
        %v807 = vpop.f32.mrb[0].mxu0
        %808 = vdwg.mxu0
        %809 = vmatprep.subr.mxu0 0.0
        %v810 = vand.u32 %v273, 4294901760
        %811 = vmatpush1.msra.mxu0 %v810
        %812 = vmatprep.subr.mxu0 0.0
        %v813 = vand.u32 %v274, 4294901760
        %814 = vmatpush1.msra.mxu0 %v813
        %815 = vmatprep.subr.mxu0 0.0
        %v816 = vand.u32 %v328, 4294901760
        %817 = vmatpush1.msra.mxu0 %v816
        %818 = vmatprep.subr.mxu0 0.0
        %v819 = vand.u32 %v330, 4294901760
        %820 = vmatpush1.msra.mxu0 %v819
        %821 = vmatprep.subr.mxu0 0.0
        %v822 = vand.u32 %v334, 4294901760
        %823 = vmatpush1.msra.mxu0 %v822
        %824 = vmatprep.subr.mxu0 0.0
        %v825 = vand.u32 %v336, 4294901760
        %826 = vmatpush1.msra.mxu0 %v825
        %827 = vmatprep.subr.mxu0 0.0
        %v828 = vand.u32 %v293, 4294901760
        %829 = vmatpush1.msra.mxu0 %v828
        %830 = vmatprep.subr.mxu0 0.0
        %v831 = vand.u32 %v294, 4294901760
        %832 = vmatpush1.msra.mxu0 %v831
        %833 = vmatprep.subr.mxu0 0.0
        %v834 = vand.u32 %v342, 4294901760
        %835 = vmatpush1.msra.mxu0 %v834
        %836 = vmatprep.subr.mxu0 0.0
        %v837 = vand.u32 %v344, 4294901760
        %838 = vmatpush1.msra.mxu0 %v837
        %839 = vmatprep.subr.mxu0 0.0
        %v840 = vand.u32 %v348, 4294901760
        %841 = vmatpush1.msra.mxu0 %v840
        %842 = vmatprep.subr.mxu0 0.0
        %v843 = vand.u32 %v350, 4294901760
        %844 = vmatpush1.msra.mxu0 %v843
        %845 = vmatprep.subr.mxu0 0.0
        %v846 = vand.u32 %v323, 4294901760
        %847 = vmatpush1.msra.mxu0 %v846
        %848 = vmatprep.subr.mxu0 0.0
        %v849 = vand.u32 %v324, 4294901760
        %850 = vmatpush1.msra.mxu0 %v849
        %851 = vmatprep.subr.mxu0 0.0
        %v852 = vand.u32 %v356, 4294901760
        %853 = vmatpush1.msra.mxu0 %v852
        %854 = vmatprep.subr.mxu0 0.0
        %v855 = vand.u32 %v358, 4294901760
        %856 = vmatpush1.msra.mxu0 %v855
        %857 = vmatprep.subr.mxu0 0.0
        %v858 = vand.u32 %v362, 4294901760
        %859 = vmatpush1.msra.mxu0 %v858
        %860 = vmatprep.subr.mxu0 0.0
        %v861 = vand.u32 %v364, 4294901760
        %862 = vmatpush1.msra.mxu0 %v861
        %863 = vmatprep.subr.mxu0 0.0
        %864 = vmatpush1.msra.mxu0 0.0
        %865 = vmatprep.subr.mxu0 0.0
        %866 = vmatpush1.msra.mxu0 0.0
        %867 = vmatprep.subr.mxu0 0.0
        %868 = vmatpush1.msra.mxu0 0.0
        %869 = vmatprep.subr.mxu0 0.0
        %870 = vmatpush1.msra.mxu0 0.0
        %871 = vmatprep.subr.mxu0 0.0
        %872 = vmatpush1.msra.mxu0 0.0
        %873 = vmatprep.subr.mxu0 0.0
        %874 = vmatpush1.msra.mxu0 0.0
        %875 = vmatprep.subr.mxu0 0.0
        %876 = vmatpush1.msra.mxu0 0.0
        %877 = vmatprep.subr.mxu0 0.0
        %878 = vmatpush1.msra.mxu0 0.0
        %879 = vmatprep.subr.mxu0 0.0
        %880 = vmatpush1.msra.mxu0 0.0
        %881 = vmatprep.subr.mxu0 0.0
        %882 = vmatpush1.msra.mxu0 0.0
        %883 = vmatprep.subr.mxu0 0.0
        %884 = vmatpush1.msra.mxu0 0.0
        %885 = vmatprep.subr.mxu0 0.0
        %886 = vmatpush1.msra.mxu0 0.0
        %887 = vmatprep.subr.mxu0 0.0
        %888 = vmatpush1.msra.mxu0 0.0
        %889 = vmatprep.subr.mxu0 0.0
        %890 = vmatpush1.msra.mxu0 0.0
        %v891 = vand.u32 %v369, 4294901760
        %v892 = vsub.f32 %v369, %v891
        %v893 = vand.u32 %v892, 4294901760
        %894 = vmatprep.mubr.f32.mxu0 %v893
        %v895 = vand.u32 %v223, 4294901760
        %v896 = vsub.f32 %v223, %v895
        %v897 = vand.u32 %v896, 4294901760
        %898 = vmatmul.mubr.f32.gmra.mrb[0].mxu0 %v897
        %v899 = vpop.f32.mrb[0].mxu0
        %v900 = vadd.f32 %v788, %v899
        %v901 = vpop.f32.mrb[0].mxu0
        %v902 = vand.u32 %v372, 4294901760
        %v903 = vsub.f32 %v372, %v902
        %v904 = vand.u32 %v903, 4294901760
        %905 = vmatprep.mubr.f32.mxu0 %v904
        %v906 = vand.u32 %v225, 4294901760
        %v907 = vsub.f32 %v225, %v906
        %v908 = vand.u32 %v907, 4294901760
        %909 = vmatmul.mubr.f32.gmra.mrb[0].mxu0 %v908
        %v910 = vpop.f32.mrb[0].mxu0
        %v911 = vadd.f32 %v797, %v910
        %v912 = vpop.f32.mrb[0].mxu0
        %v913 = vand.u32 %v375, 4294901760
        %v914 = vsub.f32 %v375, %v913
        %v915 = vand.u32 %v914, 4294901760
        %916 = vmatprep.mubr.f32.mxu0 %v915
        %v917 = vand.u32 %v227, 4294901760
        %v918 = vsub.f32 %v227, %v917
        %v919 = vand.u32 %v918, 4294901760
        %920 = vmatmul.mubr.f32.gmra.mrb[0].mxu0 %v919
        %v921 = vpop.f32.mrb[0].mxu0
        %v922 = vadd.f32 %v806, %v921
        %v923 = vpop.f32.mrb[0].mxu0
        %924 = vdwg.mxu0
        %925 = vmatprep.subr.mxu0 0.0
        %v926 = vand.u32 %v273, 4294901760
        %v927 = vsub.f32 %v273, %v926
        %v928 = vand.u32 %v927, 4294901760
        %929 = vmatpush1.msra.mxu0 %v928
        %930 = vmatprep.subr.mxu0 0.0
        %v931 = vand.u32 %v274, 4294901760
        %v932 = vsub.f32 %v274, %v931
        %v933 = vand.u32 %v932, 4294901760
        %934 = vmatpush1.msra.mxu0 %v933
        %935 = vmatprep.subr.mxu0 0.0
        %v936 = vand.u32 %v328, 4294901760
        %v937 = vsub.f32 %v328, %v936
        %v938 = vand.u32 %v937, 4294901760
        %939 = vmatpush1.msra.mxu0 %v938
        %940 = vmatprep.subr.mxu0 0.0
        %v941 = vand.u32 %v330, 4294901760
        %v942 = vsub.f32 %v330, %v941
        %v943 = vand.u32 %v942, 4294901760
        %944 = vmatpush1.msra.mxu0 %v943
        %945 = vmatprep.subr.mxu0 0.0
        %v946 = vand.u32 %v334, 4294901760
        %v947 = vsub.f32 %v334, %v946
        %v948 = vand.u32 %v947, 4294901760
        %949 = vmatpush1.msra.mxu0 %v948
        %950 = vmatprep.subr.mxu0 0.0
        %v951 = vand.u32 %v336, 4294901760
        %v952 = vsub.f32 %v336, %v951
        %v953 = vand.u32 %v952, 4294901760
        %954 = vmatpush1.msra.mxu0 %v953
        %955 = vmatprep.subr.mxu0 0.0
        %v956 = vand.u32 %v293, 4294901760
        %v957 = vsub.f32 %v293, %v956
        %v958 = vand.u32 %v957, 4294901760
        %959 = vmatpush1.msra.mxu0 %v958
        %960 = vmatprep.subr.mxu0 0.0
        %v961 = vand.u32 %v294, 4294901760
        %v962 = vsub.f32 %v294, %v961
        %v963 = vand.u32 %v962, 4294901760
        %964 = vmatpush1.msra.mxu0 %v963
        %965 = vmatprep.subr.mxu0 0.0
        %v966 = vand.u32 %v342, 4294901760
        %v967 = vsub.f32 %v342, %v966
        %v968 = vand.u32 %v967, 4294901760
        %969 = vmatpush1.msra.mxu0 %v968
        %970 = vmatprep.subr.mxu0 0.0
        %v971 = vand.u32 %v344, 4294901760
        %v972 = vsub.f32 %v344, %v971
        %v973 = vand.u32 %v972, 4294901760
        %974 = vmatpush1.msra.mxu0 %v973
        %975 = vmatprep.subr.mxu0 0.0
        %v976 = vand.u32 %v348, 4294901760
        %v977 = vsub.f32 %v348, %v976
        %v978 = vand.u32 %v977, 4294901760
        %979 = vmatpush1.msra.mxu0 %v978
        %980 = vmatprep.subr.mxu0 0.0
        %v981 = vand.u32 %v350, 4294901760
        %v982 = vsub.f32 %v350, %v981
        %v983 = vand.u32 %v982, 4294901760
        %984 = vmatpush1.msra.mxu0 %v983
        %985 = vmatprep.subr.mxu0 0.0
        %v986 = vand.u32 %v323, 4294901760
        %v987 = vsub.f32 %v323, %v986
        %v988 = vand.u32 %v987, 4294901760
        %989 = vmatpush1.msra.mxu0 %v988
        %990 = vmatprep.subr.mxu0 0.0
        %v991 = vand.u32 %v324, 4294901760
        %v992 = vsub.f32 %v324, %v991
        %v993 = vand.u32 %v992, 4294901760
        %994 = vmatpush1.msra.mxu0 %v993
        %995 = vmatprep.subr.mxu0 0.0
        %v996 = vand.u32 %v356, 4294901760
        %v997 = vsub.f32 %v356, %v996
        %v998 = vand.u32 %v997, 4294901760
        %999 = vmatpush1.msra.mxu0 %v998
        %1000 = vmatprep.subr.mxu0 0.0
        %v1001 = vand.u32 %v358, 4294901760
        %v1002 = vsub.f32 %v358, %v1001
        %v1003 = vand.u32 %v1002, 4294901760
        %1004 = vmatpush1.msra.mxu0 %v1003
        %1005 = vmatprep.subr.mxu0 0.0
        %v1006 = vand.u32 %v362, 4294901760
        %v1007 = vsub.f32 %v362, %v1006
        %v1008 = vand.u32 %v1007, 4294901760
        %1009 = vmatpush1.msra.mxu0 %v1008
        %1010 = vmatprep.subr.mxu0 0.0
        %v1011 = vand.u32 %v364, 4294901760
        %v1012 = vsub.f32 %v364, %v1011
        %v1013 = vand.u32 %v1012, 4294901760
        %1014 = vmatpush1.msra.mxu0 %v1013
        %1015 = vmatprep.subr.mxu0 0.0
        %1016 = vmatpush1.msra.mxu0 0.0
        %1017 = vmatprep.subr.mxu0 0.0
        %1018 = vmatpush1.msra.mxu0 0.0
        %1019 = vmatprep.subr.mxu0 0.0
        %1020 = vmatpush1.msra.mxu0 0.0
        %1021 = vmatprep.subr.mxu0 0.0
        %1022 = vmatpush1.msra.mxu0 0.0
        %1023 = vmatprep.subr.mxu0 0.0
        %1024 = vmatpush1.msra.mxu0 0.0
        %1025 = vmatprep.subr.mxu0 0.0
        %1026 = vmatpush1.msra.mxu0 0.0
        %1027 = vmatprep.subr.mxu0 0.0
        %1028 = vmatpush1.msra.mxu0 0.0
        %1029 = vmatprep.subr.mxu0 0.0
        %1030 = vmatpush1.msra.mxu0 0.0
        %1031 = vmatprep.subr.mxu0 0.0
        %1032 = vmatpush1.msra.mxu0 0.0
        %1033 = vmatprep.subr.mxu0 0.0
        %1034 = vmatpush1.msra.mxu0 0.0
        %1035 = vmatprep.subr.mxu0 0.0
        %1036 = vmatpush1.msra.mxu0 0.0
        %1037 = vmatprep.subr.mxu0 0.0
        %1038 = vmatpush1.msra.mxu0 0.0
        %1039 = vmatprep.subr.mxu0 0.0
        %1040 = vmatpush1.msra.mxu0 0.0
        %1041 = vmatprep.subr.mxu0 0.0
        %1042 = vmatpush1.msra.mxu0 0.0
        %v1043 = vand.u32 %v369, 4294901760
        %1044 = vmatprep.mubr.f32.mxu0 %v1043
        %v1045 = vand.u32 %v223, 4294901760
        %1046 = vmatmul.mubr.f32.gmra.mrb[0].mxu0 %v1045
        %v1047 = vpop.f32.mrb[0].mxu0
        %v1048 = vadd.f32 %v900, %v1047
        %v1049 = vpop.f32.mrb[0].mxu0
        %v1050 = vand.u32 %v372, 4294901760
        %1051 = vmatprep.mubr.f32.mxu0 %v1050
        %v1052 = vand.u32 %v225, 4294901760
        %1053 = vmatmul.mubr.f32.gmra.mrb[0].mxu0 %v1052
        %v1054 = vpop.f32.mrb[0].mxu0
        %v1055 = vadd.f32 %v911, %v1054
        %v1056 = vpop.f32.mrb[0].mxu0
        %v1057 = vand.u32 %v375, 4294901760
        %1058 = vmatprep.mubr.f32.mxu0 %v1057
        %v1059 = vand.u32 %v227, 4294901760
        %1060 = vmatmul.mubr.f32.gmra.mrb[0].mxu0 %v1059
        %v1061 = vpop.f32.mrb[0].mxu0
        %v1062 = vadd.f32 %v922, %v1061
        %v1063 = vpop.f32.mrb[0].mxu0
        %1064 = vdwg.mxu0
        %1065 = vmatprep.subr.mxu0 0.0
        %v1066 = vand.u32 %v273, 4294901760
        %1067 = vmatpush1.msra.mxu0 %v1066
        %1068 = vmatprep.subr.mxu0 0.0
        %v1069 = vand.u32 %v274, 4294901760
        %1070 = vmatpush1.msra.mxu0 %v1069
        %1071 = vmatprep.subr.mxu0 0.0
        %v1072 = vand.u32 %v328, 4294901760
        %1073 = vmatpush1.msra.mxu0 %v1072
        %1074 = vmatprep.subr.mxu0 0.0
        %v1075 = vand.u32 %v330, 4294901760
        %1076 = vmatpush1.msra.mxu0 %v1075
        %1077 = vmatprep.subr.mxu0 0.0
        %v1078 = vand.u32 %v334, 4294901760
        %1079 = vmatpush1.msra.mxu0 %v1078
        %1080 = vmatprep.subr.mxu0 0.0
        %v1081 = vand.u32 %v336, 4294901760
        %1082 = vmatpush1.msra.mxu0 %v1081
        %1083 = vmatprep.subr.mxu0 0.0
        %v1084 = vand.u32 %v293, 4294901760
        %1085 = vmatpush1.msra.mxu0 %v1084
        %1086 = vmatprep.subr.mxu0 0.0
        %v1087 = vand.u32 %v294, 4294901760
        %1088 = vmatpush1.msra.mxu0 %v1087
        %1089 = vmatprep.subr.mxu0 0.0
        %v1090 = vand.u32 %v342, 4294901760
        %1091 = vmatpush1.msra.mxu0 %v1090
        %1092 = vmatprep.subr.mxu0 0.0
        %v1093 = vand.u32 %v344, 4294901760
        %1094 = vmatpush1.msra.mxu0 %v1093
        %1095 = vmatprep.subr.mxu0 0.0
        %v1096 = vand.u32 %v348, 4294901760
        %1097 = vmatpush1.msra.mxu0 %v1096
        %1098 = vmatprep.subr.mxu0 0.0
        %v1099 = vand.u32 %v350, 4294901760
        %1100 = vmatpush1.msra.mxu0 %v1099
        %1101 = vmatprep.subr.mxu0 0.0
        %v1102 = vand.u32 %v323, 4294901760
        %1103 = vmatpush1.msra.mxu0 %v1102
        %1104 = vmatprep.subr.mxu0 0.0
        %v1105 = vand.u32 %v324, 4294901760
        %1106 = vmatpush1.msra.mxu0 %v1105
        %1107 = vmatprep.subr.mxu0 0.0
        %v1108 = vand.u32 %v356, 4294901760
        %1109 = vmatpush1.msra.mxu0 %v1108
        %1110 = vmatprep.subr.mxu0 0.0
        %v1111 = vand.u32 %v358, 4294901760
        %1112 = vmatpush1.msra.mxu0 %v1111
        %1113 = vmatprep.subr.mxu0 0.0
        %v1114 = vand.u32 %v362, 4294901760
        %1115 = vmatpush1.msra.mxu0 %v1114
        %1116 = vmatprep.subr.mxu0 0.0
        %v1117 = vand.u32 %v364, 4294901760
        %1118 = vmatpush1.msra.mxu0 %v1117
        %1119 = vmatprep.subr.mxu0 0.0
        %1120 = vmatpush1.msra.mxu0 0.0
        %1121 = vmatprep.subr.mxu0 0.0
        %1122 = vmatpush1.msra.mxu0 0.0
        %1123 = vmatprep.subr.mxu0 0.0
        %1124 = vmatpush1.msra.mxu0 0.0
        %1125 = vmatprep.subr.mxu0 0.0
        %1126 = vmatpush1.msra.mxu0 0.0
        %1127 = vmatprep.subr.mxu0 0.0
        %1128 = vmatpush1.msra.mxu0 0.0
        %1129 = vmatprep.subr.mxu0 0.0
        %1130 = vmatpush1.msra.mxu0 0.0
        %1131 = vmatprep.subr.mxu0 0.0
        %1132 = vmatpush1.msra.mxu0 0.0
        %1133 = vmatprep.subr.mxu0 0.0
        %1134 = vmatpush1.msra.mxu0 0.0
        %1135 = vmatprep.subr.mxu0 0.0
        %1136 = vmatpush1.msra.mxu0 0.0
        %1137 = vmatprep.subr.mxu0 0.0
        %1138 = vmatpush1.msra.mxu0 0.0
        %1139 = vmatprep.subr.mxu0 0.0
        %1140 = vmatpush1.msra.mxu0 0.0
        %1141 = vmatprep.subr.mxu0 0.0
        %1142 = vmatpush1.msra.mxu0 0.0
        %1143 = vmatprep.subr.mxu0 0.0
        %1144 = vmatpush1.msra.mxu0 0.0
        %1145 = vmatprep.subr.mxu0 0.0
        %1146 = vmatpush1.msra.mxu0 0.0
        %v1147 = vand.u32 %v369, 4294901760
        %1148 = vmatprep.mubr.f32.mxu0 %v1147
        %v1149 = vand.u32 %v223, 4294901760
        %1150 = vmatmul.mubr.f32.gmra.mrb[0].mxu0 %v1149
        %v1151 = vpop.f32.mrb[0].mxu0
        %v1152 = vadd.f32 %v1048, %v1151
        %v1153 = vpop.f32.mrb[0].mxu0
        %v1154 = vand.u32 %v372, 4294901760
        %1155 = vmatprep.mubr.f32.mxu0 %v1154
        %v1156 = vand.u32 %v225, 4294901760
        %1157 = vmatmul.mubr.f32.gmra.mrb[0].mxu0 %v1156
        %v1158 = vpop.f32.mrb[0].mxu0
        %v1159 = vadd.f32 %v1055, %v1158
        %v1160 = vpop.f32.mrb[0].mxu0
        %v1161 = vand.u32 %v375, 4294901760
        %1162 = vmatprep.mubr.f32.mxu0 %v1161
        %v1163 = vand.u32 %v227, 4294901760
        %1164 = vmatmul.mubr.f32.gmra.mrb[0].mxu0 %v1163
        %v1165 = vpop.f32.mrb[0].mxu0
        %v1166 = vadd.f32 %v1062, %v1165
        %v1167 = vpop.f32.mrb[0].mxu0
        %1168 = vdwg.mxu0
        %1170 = vset.pattern.permute.xlu0 0
        %1171 = vperm.xlu0 %1170, %v229
        %v1172 = vpop.permute.xlu0 %1171
        %1175 = vset.pattern.permute.xlu0 0
        %1176 = vperm.xlu0 %1175, %v230
        %v1177 = vpop.permute.xlu0 %1176
        %1180 = vset.pattern.permute.xlu0 0
        %1181 = vperm.xlu0 %1180, %v231
        %v1182 = vpop.permute.xlu0 %1181
        %v1184 = vmul.f32 %v1152, %v1172
        %v1185 = vmul.f32 %v1159, %v1177
        %v1186 = vmul.f32 %v1166, %v1182
        %1188 = vset.pattern.permute.xlu0 0
        %1189 = vperm.xlu0 %1188, %v232
        %v1190 = vpop.permute.xlu0 %1189
        %1193 = vset.pattern.permute.xlu0 0
        %1194 = vperm.xlu0 %1193, %v233
        %v1195 = vpop.permute.xlu0 %1194
        %1198 = vset.pattern.permute.xlu0 0
        %1199 = vperm.xlu0 %1198, %v234
        %v1200 = vpop.permute.xlu0 %1199
        %v1202 = vadd.f32 %v1184, %v1190
        %v1203 = vadd.f32 %v1185, %v1195
        %v1204 = vadd.f32 %v1186, %v1200
        %v1205 = vmax.f32 %v1202, 0.0
        %v1206 = vmax.f32 %v1203, 0.0
        %v1207 = vmax.f32 %v1204, 0.0
        %s1208 = smul.u32 %s237, 24
        %s1209 = scalar_lea.vmem %s221, %s1208
        %vm1210 = vcmask 64512
        %1211 = vst.msk [vmem:[%s1209] sm:$0xff] %vm1210, %v1205
        %1212 = vst.msk [vmem:[%s1209 + $0x8] sm:$0xff] %vm1210, %v1206
        %vm1213 = vcmask 60416
        %1214 = vst.msk [vmem:[%s1209 + $0x10] sm:$0xf] %vm1213, %v1207
      $region41: #{wtfd_cat_forward.1} parent=35 // loop_footer
        %s241 = sadd.s32 1, %s237
      $region42: #{wtfd_cat_forward.1} parent=35 // loop_footer_branch
        %236 = sbr.rel target = $region38
      $region43: #{wtfd_cat_forward.1} parent=35 // loop_exit
        _
      %s1215 = smul.u32 8, %s20
      %p1216 = scmp.lt.s32.totalorder %s19, 1
      %s1217 = scalar_select %p1216, %s19, 1
      %p1218 = scmp.lt.s32.totalorder %s1215, 7
      %s1219 = scalar_select %p1218, %s1215, 7
      %s1220 = smul.addr %s1219, 3
      %s1221 = smul.addr %s1217, 24
      %s1222 = sadd.s32 %s1220, %s1221
      %s1223 = smul.addr %s1222, 8
      %s1224 = scalar_lea.vmem %s4, %s1223
      // Predicated region
      $region44: #{wtfd_cat_forward.1} parent=35 // pred_check
        %p1225 = pneg %p136
      $region45: #{wtfd_cat_forward.1} parent=35 // pred_check_branch
        %1227 = sbr.rel (%p1225) target = $region47
      $region46: #{wtfd_cat_forward.1} parent=35 // pred_region
        %s1228 = smul.u32 8, %s20
      $region47: #{wtfd_cat_forward.1} parent=35 // pred_fallthru
        _
    $region36: #{wtfd_cat_forward.1} parent=5 // pred_fallthru
      _
    %p1229 = scmp.le.s32.totalorder 2, %s10
    // Predicated region
    $region48: #{wtfd_cat_forward.1} parent=5 // pred_check
      %p1230 = pneg %p1229
    $region49: #{wtfd_cat_forward.1} parent=5 // pred_check_branch
      %1232 = sbr.rel (%p1230) target = $region51
    $region50: #{wtfd_cat_forward.1} parent=5 // pred_region
      %s1233 = ssub.s32 %s10, 2
      // Predicated region
      $region52: #{wtfd_cat_forward.1} parent=50 // pred_check
        %p1234 = pneg %p142
      $region53: #{wtfd_cat_forward.1} parent=50 // pred_check_branch
        %1236 = sbr.rel (%p1234) target = $region55
      $region54: #{wtfd_cat_forward.1} parent=50 // pred_region
        %s1237 = smul.u32 8, %s22
        %p1238 = scmp.lt.s32.totalorder %s21, 1
        %s1239 = scalar_select %p1238, %s21, 1
        %p1240 = scmp.lt.s32.totalorder %s1237, 7
        %s1241 = scalar_select %p1240, %s1237, 7
        %s1242 = smul.addr %s1241, 3
        %s1243 = smul.addr %s1239, 24
        %s1244 = sadd.s32 %s1242, %s1243
        %s1245 = smul.addr %s1244, 8
        %s1246 = scalar_lea.vmem %s4, %s1245
      $region55: #{wtfd_cat_forward.1} parent=50 // pred_fallthru
        _
    $region51: #{wtfd_cat_forward.1} parent=5 // pred_fallthru
      _
  $region6: #{wtfd_cat_forward.1} parent=0 // loop_footer
    %s14 = sadd.s32 1, %s10
  $region7: #{wtfd_cat_forward.1} parent=0 // loop_footer_branch
    %9 = sbr.rel target = $region3
  $region8: #{wtfd_cat_forward.1} parent=0 // loop_exit
    _

</llo_original>
